<compile_context>
chip_gen: v7x
topology: tpu7x:2x2x1
jax: 0.10.0
libtpu: 0.0.40
codegen_flags: <defaults>
</compile_context>

<pallas_src>
import jax
import jax.numpy as jnp
from jax import lax
from jax.experimental import pallas as pl
from jax.experimental.pallas import tpu as pltpu


def _round_up(x, m):
    return ((x + m - 1) // m) * m


def _sigmoid(x):
    # Explicit exp + exact divide (guaranteed Mosaic lowering, exact numerics).
    return 1.0 / (1.0 + jnp.exp(-x))


# ----------------------------------------------------------------------------
# Pallas kernel: embedding gather + full GRU recurrence in one invocation.
#
# PyTorch nn.GRU gate equations (gate order r, z, n):
#   r = sigmoid(x W_ir + b_ir + h W_hr + b_hr)
#   z = sigmoid(x W_iz + b_iz + h W_hz + b_hz)
#   n = tanh   (x W_in + b_in + r * (h W_hn + b_hn))
#   h = (1 - z) * n + z * h
#
# Layout (GP = per-gate lane slab, a multiple of 128):
#   q_ref    : (T*B, 1) int32   time-major flattened token ids
#   emb_ref  : (V_pad, H) f32   embedding table (rows >= V are zero)
#   w_ih_ref : (H,  3*GP) f32   [W_ir | W_iz | W_in]^T, one 128-lane slab per gate
#   w_hh_ref : (GP, 3*GP) f32   [W_hr | W_hz | W_hn]^T, per-gate slabs, rows >= H zero
#   b_ih_ref : (1,  3*GP) f32   [b_ir+b_hr | b_iz+b_hz | b_in]  (r/z hidden biases folded)
#   b_hn_ref : (1,  GP)   f32   b_hn (added inside the r*(...) term each step)
#   h_ref    : (B, H)     f32   final hidden state (output)
# ----------------------------------------------------------------------------
def gru_question_kernel(q_ref, emb_ref, w_ih_ref, w_hh_ref, b_ih_ref, b_hn_ref,
                        h_ref):
    B, H = h_ref.shape
    TB = q_ref.shape[0]
    T = TB // B
    V = emb_ref.shape[0]
    GP = b_hn_ref.shape[1]

    # ---- prologue (entirely off the serial h-chain) ------------------------
    # Embedding gather as a one-hot MXU matmul over the VMEM-resident table.
    ids = q_ref[...]                                                 # (T*B, 1)
    vocab_iota = lax.broadcasted_iota(jnp.int32, (TB, V), 1)
    onehot = jnp.where(ids == vocab_iota, 1.0, 0.0).astype(jnp.float32)
    x = jnp.dot(onehot, emb_ref[...],
                preferred_element_type=jnp.float32)                  # (T*B, H)

    # Hoisted input projection for ALL time steps: one big matmul.
    gi = jnp.dot(x, w_ih_ref[...],
                 preferred_element_type=jnp.float32) + b_ih_ref[...]  # (T*B, 3GP)

    w_hh = w_hh_ref[...]
    b_hn = b_hn_ref[...]                                              # (1, GP)

    # ---- recurrence ---------------------------------------------------------
    # Peeled step t = 0: h0 == 0  =>  h @ W_hh == 0, no MXU on the chain.
    gi0 = gi[0:B, :]
    rz0 = _sigmoid(gi0[:, :2 * GP])
    r0 = rz0[:, :GP]
    z0 = rz0[:, GP:2 * GP]
    n0 = jnp.tanh(gi0[:, 2 * GP:] + r0 * b_hn)
    h = (1.0 - z0) * n0                                               # (B, GP); z0*h0 == 0

    # Remaining steps: static unroll (T small & static). All slices below are
    # vreg-aligned (lane 0 / GP / 2*GP), so no cross-lane traffic per step.
    # For T >~ 16 switch to lax.fori_loop(..., unroll=4..8).
    for t in range(1, T):
        gh = jnp.dot(h, w_hh, preferred_element_type=jnp.float32)     # (B, 3GP)
        gi_t = gi[t * B:(t + 1) * B, :]
        rz = _sigmoid(gi_t[:, :2 * GP] + gh[:, :2 * GP])
        r = rz[:, :GP]
        z = rz[:, GP:2 * GP]
        n = jnp.tanh(gi_t[:, 2 * GP:] + r * (gh[:, 2 * GP:] + b_hn))
        h = (1.0 - z) * n + z * h

    h_ref[...] = h[:, :H]


def gru_final_hidden_pallas(q_tm_flat, prep, B_pad, H):
    vmem = pl.BlockSpec(memory_space=pltpu.MemorySpace.VMEM)
    # TODO(synk): for production batches >= 16 on v7x, add a leading "parallel"
    # batch-block grid axis so each TensorCore runs an independent recurrence.
    return pl.pallas_call(
        gru_question_kernel,
        out_shape=jax.ShapeDtypeStruct((B_pad, H), jnp.float32),
        in_specs=[vmem, vmem, vmem, vmem, vmem, vmem],
        out_specs=vmem,
    )(q_tm_flat, prep["emb"], prep["w_ih"], prep["w_hh"], prep["b_ih"],
      prep["b_hn"])


# ----------------------------------------------------------------------------
# One-time parameter repacking: per-gate 128-lane slabs, folded r/z hidden
# biases, sublane-padded vocab.  Fused layout corresponds to PyTorch nn.GRU:
# w_ih == weight_ih_l0.T (gate order [r|z|n]), w_hh == weight_hh_l0.T,
# b_ih / b_hh == bias_ih_l0 / bias_hh_l0 reshaped to (1, 3H).
# ----------------------------------------------------------------------------
def prepare_params_for_tpu(emb_table, params):
    V, H = emb_table.shape
    GP = _round_up(H, 128)                 # per-gate lane slab (>= 128)
    V_pad = _round_up(V, 8)

    emb_p = jnp.pad(emb_table.astype(jnp.float32), ((0, V_pad - V), (0, 0)))

    def gates(w):
        return w[..., :H], w[..., H:2 * H], w[..., 2 * H:3 * H]

    def lane_pad(w):
        return jnp.pad(w, [(0, 0)] * (w.ndim - 1) + [(0, GP - H)])

    wr, wz, wn = gates(params["w_ih"])
    w_ih_p = jnp.concatenate([lane_pad(wr), lane_pad(wz), lane_pad(wn)], axis=1)

    ur, uz, un = gates(params["w_hh"])
    w_hh_p = jnp.concatenate([lane_pad(ur), lane_pad(uz), lane_pad(un)], axis=1)
    w_hh_p = jnp.pad(w_hh_p, ((0, GP - H), (0, 0)))     # rows padded to hidden slab

    bir, biz, bin_ = gates(params["b_ih"])
    bhr, bhz, bhn = gates(params["b_hh"])
    b_ih_p = jnp.concatenate(
        [lane_pad(bir + bhr), lane_pad(biz + bhz), lane_pad(bin_)], axis=1)
    b_hn_p = lane_pad(bhn)

    return {"emb": emb_p, "w_ih": w_ih_p, "w_hh": w_hh_p,
            "b_ih": b_ih_p, "b_hn": b_hn_p}


def question_module_forward(questions, prep):
    """Mirrors QuestionModule.forward: embed -> GRU -> h_n.transpose(0, 1)."""
    B, T = questions.shape
    H = prep["emb"].shape[1]
    B_pad = _round_up(B, 8)                              # sublane-pad batch

    q = questions.astype(jnp.int32)
    if B_pad != B:
        q = jnp.pad(q, ((0, B_pad - B), (0, 0)))         # id-0 pad rows, discarded below
    # Tiny int-only staging (256 bytes, no float HBM traffic): time-major ids.
    q_tm_flat = jnp.transpose(q, (1, 0)).reshape(T * B_pad, 1)

    h_final = gru_final_hidden_pallas(q_tm_flat, prep, B_pad, H)
    return h_final[:B, None, :]                          # (B, 1, H)


# ----------------------------------------------------------------------------
# Pure-JAX reference (lax.scan GRU) for validation.
# ----------------------------------------------------------------------------
def gru_reference(x_emb, params):
    B, T, H = x_emb.shape
    w_ih, w_hh = params["w_ih"], params["w_hh"]
    b_ih, b_hh = params["b_ih"], params["b_hh"]

    def step(h, x):
        gi = x @ w_ih + b_ih
        gh = h @ w_hh + b_hh
        r = jax.nn.sigmoid(gi[:, :H] + gh[:, :H])
        z = jax.nn.sigmoid(gi[:, H:2 * H] + gh[:, H:2 * H])
        n = jnp.tanh(gi[:, 2 * H:] + r * gh[:, 2 * H:])
        return (1.0 - z) * n + z * h, None

    h0 = jnp.zeros((B, H), jnp.float32)
    h_final, _ = lax.scan(step, h0, jnp.transpose(x_emb, (1, 0, 2)))
    return h_final[:, None, :]


def init_params(key, vocab_size, hidden_size):
    H = hidden_size
    k = 1.0 / jnp.sqrt(jnp.float32(H))
    keys = jax.random.split(key, 5)
    emb_table = jax.random.normal(keys[0], (vocab_size, H), jnp.float32)

    def u(kk, shape):
        return jax.random.uniform(kk, shape, jnp.float32, minval=-k, maxval=k)

    params = {
        "w_ih": u(keys[1], (H, 3 * H)),
        "w_hh": u(keys[2], (H, 3 * H)),
        "b_ih": u(keys[3], (1, 3 * H)),
        "b_hh": u(keys[4], (1, 3 * H)),
    }
    return emb_table, params


if __name__ == "__main__":
    VOCAB, HIDDEN = 50, 32
    BATCH, TOKENS = 2, 8

    key = jax.random.PRNGKey(0)
    k_param, k_q = jax.random.split(key)
    emb_table, params = init_params(k_param, VOCAB, HIDDEN)
    prep = prepare_params_for_tpu(emb_table, params)

    questions = jax.random.randint(k_q, (BATCH, TOKENS), 0, VOCAB, dtype=jnp.int32)

    fwd = jax.jit(question_module_forward)
    out = fwd(questions, prep)
    out = jax.block_until_ready(out)

    ref = gru_reference(jnp.take(emb_table, questions, axis=0), params)
    assert out.shape == (BATCH, 1, HIDDEN), out.shape
    assert jnp.allclose(out, ref, atol=1e-4, rtol=1e-4), "mismatch vs reference GRU"

    print("KERNEL_OK")
</pallas_src>

<mosaic_0001>
module attributes {stable_mosaic.version = 11 : i64} {
  func.func @gru_question_kernel(%arg0: memref<64x1xi32, #tpu.memory_space<vmem>>, %arg1: memref<56x32xf32, #tpu.memory_space<vmem>>, %arg2: memref<32x384xf32, #tpu.memory_space<vmem>>, %arg3: memref<128x384xf32, #tpu.memory_space<vmem>>, %arg4: memref<1x384xf32, #tpu.memory_space<vmem>>, %arg5: memref<1x128xf32, #tpu.memory_space<vmem>>, %arg6: memref<8x32xf32, #tpu.memory_space<vmem>>) attributes {dimension_semantics = [], scalar_prefetch = 0 : i64, scratch_operands = 0 : i64, tpu.core_type = #tpu.core_type<tc>} {
    %c0 = arith.constant 0 : index
    %c0_0 = arith.constant 0 : index
    %0 = vector.load %arg0[%c0, %c0_0] : memref<64x1xi32, #tpu.memory_space<vmem>>, vector<64x1xi32>
    %1 = tpu.iota {dimensions = array<i32: 1>} : vector<64x56xi32>
    %2 = vector.broadcast %0 : vector<64x1xi32> to vector<64x56xi32>
    %3 = arith.cmpi eq, %2, %1 : vector<64x56xi32>
    %cst = arith.constant 1.000000e+00 : f32
    %cst_1 = arith.constant 0.000000e+00 : f32
    %4 = vector.broadcast %cst : f32 to vector<64x56xf32>
    %5 = vector.broadcast %cst_1 : f32 to vector<64x56xf32>
    %6 = arith.select %3, %4, %5 : vector<64x56xi1>, vector<64x56xf32>
    %c0_2 = arith.constant 0 : index
    %c0_3 = arith.constant 0 : index
    %7 = vector.load %arg1[%c0_2, %c0_3] : memref<56x32xf32, #tpu.memory_space<vmem>>, vector<56x32xf32>
    %cst_4 = arith.constant dense<0.000000e+00> : vector<64x32xf32>
    %8 = tpu.matmul %6, %7, %cst_4 {dimension_numbers = #tpu.dot_dimension_numbers<[1], [0], [0], [1], [0, 0, 1, 1], [], []>} : vector<64x56xf32>, vector<56x32xf32>, vector<64x32xf32> -> vector<64x32xf32>
    %c0_5 = arith.constant 0 : index
    %c0_6 = arith.constant 0 : index
    %9 = vector.load %arg2[%c0_5, %c0_6] : memref<32x384xf32, #tpu.memory_space<vmem>>, vector<32x384xf32>
    %cst_7 = arith.constant dense<0.000000e+00> : vector<64x384xf32>
    %10 = tpu.matmul %8, %9, %cst_7 {dimension_numbers = #tpu.dot_dimension_numbers<[1], [0], [0], [1], [0, 0, 1, 1], [], []>} : vector<64x32xf32>, vector<32x384xf32>, vector<64x384xf32> -> vector<64x384xf32>
    %c0_8 = arith.constant 0 : index
    %c0_9 = arith.constant 0 : index
    %11 = vector.load %arg4[%c0_8, %c0_9] : memref<1x384xf32, #tpu.memory_space<vmem>>, vector<1x384xf32>
    %12 = vector.broadcast %11 : vector<1x384xf32> to vector<64x384xf32>
    %13 = arith.addf %10, %12 : vector<64x384xf32>
    %c0_10 = arith.constant 0 : index
    %c0_11 = arith.constant 0 : index
    %14 = vector.load %arg3[%c0_10, %c0_11] : memref<128x384xf32, #tpu.memory_space<vmem>>, vector<128x384xf32>
    %c0_12 = arith.constant 0 : index
    %c0_13 = arith.constant 0 : index
    %15 = vector.load %arg5[%c0_12, %c0_13] : memref<1x128xf32, #tpu.memory_space<vmem>>, vector<1x128xf32>
    %16 = vector.extract_strided_slice %13 {offsets = [0, 0], sizes = [8, 384], strides = [1, 1]} : vector<64x384xf32> to vector<8x384xf32>
    %17 = vector.extract_strided_slice %16 {offsets = [0, 0], sizes = [8, 256], strides = [1, 1]} : vector<8x384xf32> to vector<8x256xf32>
    %cst_14 = arith.constant 0.000000e+00 : f32
    %18 = vector.broadcast %cst_14 : f32 to vector<8x256xf32>
    %19 = arith.subf %18, %17 : vector<8x256xf32>
    %20 = math.exp %19 : vector<8x256xf32>
    %cst_15 = arith.constant 1.000000e+00 : f32
    %21 = vector.broadcast %cst_15 : f32 to vector<8x256xf32>
    %22 = arith.addf %21, %20 : vector<8x256xf32>
    %cst_16 = arith.constant 1.000000e+00 : f32
    %23 = vector.broadcast %cst_16 : f32 to vector<8x256xf32>
    %24 = arith.divf %23, %22 : vector<8x256xf32>
    %25 = vector.extract_strided_slice %24 {offsets = [0, 0], sizes = [8, 128], strides = [1, 1]} : vector<8x256xf32> to vector<8x128xf32>
    %26 = vector.extract_strided_slice %24 {offsets = [0, 128], sizes = [8, 128], strides = [1, 1]} : vector<8x256xf32> to vector<8x128xf32>
    %27 = vector.extract_strided_slice %16 {offsets = [0, 256], sizes = [8, 128], strides = [1, 1]} : vector<8x384xf32> to vector<8x128xf32>
    %28 = vector.broadcast %15 : vector<1x128xf32> to vector<8x128xf32>
    %29 = arith.mulf %25, %28 : vector<8x128xf32>
    %30 = arith.addf %27, %29 : vector<8x128xf32>
    %31 = math.tanh %30 : vector<8x128xf32>
    %cst_17 = arith.constant 1.000000e+00 : f32
    %32 = vector.broadcast %cst_17 : f32 to vector<8x128xf32>
    %33 = arith.subf %32, %26 : vector<8x128xf32>
    %34 = arith.mulf %33, %31 : vector<8x128xf32>
    %cst_18 = arith.constant dense<0.000000e+00> : vector<8x384xf32>
    %35 = tpu.matmul %34, %14, %cst_18 {dimension_numbers = #tpu.dot_dimension_numbers<[1], [0], [0], [1], [0, 0, 1, 1], [], []>} : vector<8x128xf32>, vector<128x384xf32>, vector<8x384xf32> -> vector<8x384xf32>
    %36 = vector.extract_strided_slice %13 {offsets = [8, 0], sizes = [8, 384], strides = [1, 1]} : vector<64x384xf32> to vector<8x384xf32>
    %37 = vector.extract_strided_slice %36 {offsets = [0, 0], sizes = [8, 256], strides = [1, 1]} : vector<8x384xf32> to vector<8x256xf32>
    %38 = vector.extract_strided_slice %35 {offsets = [0, 0], sizes = [8, 256], strides = [1, 1]} : vector<8x384xf32> to vector<8x256xf32>
    %39 = arith.addf %37, %38 : vector<8x256xf32>
    %cst_19 = arith.constant 0.000000e+00 : f32
    %40 = vector.broadcast %cst_19 : f32 to vector<8x256xf32>
    %41 = arith.subf %40, %39 : vector<8x256xf32>
    %42 = math.exp %41 : vector<8x256xf32>
    %cst_20 = arith.constant 1.000000e+00 : f32
    %43 = vector.broadcast %cst_20 : f32 to vector<8x256xf32>
    %44 = arith.addf %43, %42 : vector<8x256xf32>
    %cst_21 = arith.constant 1.000000e+00 : f32
    %45 = vector.broadcast %cst_21 : f32 to vector<8x256xf32>
    %46 = arith.divf %45, %44 : vector<8x256xf32>
    %47 = vector.extract_strided_slice %46 {offsets = [0, 0], sizes = [8, 128], strides = [1, 1]} : vector<8x256xf32> to vector<8x128xf32>
    %48 = vector.extract_strided_slice %46 {offsets = [0, 128], sizes = [8, 128], strides = [1, 1]} : vector<8x256xf32> to vector<8x128xf32>
    %49 = vector.extract_strided_slice %36 {offsets = [0, 256], sizes = [8, 128], strides = [1, 1]} : vector<8x384xf32> to vector<8x128xf32>
    %50 = vector.extract_strided_slice %35 {offsets = [0, 256], sizes = [8, 128], strides = [1, 1]} : vector<8x384xf32> to vector<8x128xf32>
    %51 = vector.broadcast %15 : vector<1x128xf32> to vector<8x128xf32>
    %52 = arith.addf %50, %51 : vector<8x128xf32>
    %53 = arith.mulf %47, %52 : vector<8x128xf32>
    %54 = arith.addf %49, %53 : vector<8x128xf32>
    %55 = math.tanh %54 : vector<8x128xf32>
    %cst_22 = arith.constant 1.000000e+00 : f32
    %56 = vector.broadcast %cst_22 : f32 to vector<8x128xf32>
    %57 = arith.subf %56, %48 : vector<8x128xf32>
    %58 = arith.mulf %57, %55 : vector<8x128xf32>
    %59 = arith.mulf %48, %34 : vector<8x128xf32>
    %60 = arith.addf %58, %59 : vector<8x128xf32>
    %cst_23 = arith.constant dense<0.000000e+00> : vector<8x384xf32>
    %61 = tpu.matmul %60, %14, %cst_23 {dimension_numbers = #tpu.dot_dimension_numbers<[1], [0], [0], [1], [0, 0, 1, 1], [], []>} : vector<8x128xf32>, vector<128x384xf32>, vector<8x384xf32> -> vector<8x384xf32>
    %62 = vector.extract_strided_slice %13 {offsets = [16, 0], sizes = [8, 384], strides = [1, 1]} : vector<64x384xf32> to vector<8x384xf32>
    %63 = vector.extract_strided_slice %62 {offsets = [0, 0], sizes = [8, 256], strides = [1, 1]} : vector<8x384xf32> to vector<8x256xf32>
    %64 = vector.extract_strided_slice %61 {offsets = [0, 0], sizes = [8, 256], strides = [1, 1]} : vector<8x384xf32> to vector<8x256xf32>
    %65 = arith.addf %63, %64 : vector<8x256xf32>
    %cst_24 = arith.constant 0.000000e+00 : f32
    %66 = vector.broadcast %cst_24 : f32 to vector<8x256xf32>
    %67 = arith.subf %66, %65 : vector<8x256xf32>
    %68 = math.exp %67 : vector<8x256xf32>
    %cst_25 = arith.constant 1.000000e+00 : f32
    %69 = vector.broadcast %cst_25 : f32 to vector<8x256xf32>
    %70 = arith.addf %69, %68 : vector<8x256xf32>
    %cst_26 = arith.constant 1.000000e+00 : f32
    %71 = vector.broadcast %cst_26 : f32 to vector<8x256xf32>
    %72 = arith.divf %71, %70 : vector<8x256xf32>
    %73 = vector.extract_strided_slice %72 {offsets = [0, 0], sizes = [8, 128], strides = [1, 1]} : vector<8x256xf32> to vector<8x128xf32>
    %74 = vector.extract_strided_slice %72 {offsets = [0, 128], sizes = [8, 128], strides = [1, 1]} : vector<8x256xf32> to vector<8x128xf32>
    %75 = vector.extract_strided_slice %62 {offsets = [0, 256], sizes = [8, 128], strides = [1, 1]} : vector<8x384xf32> to vector<8x128xf32>
    %76 = vector.extract_strided_slice %61 {offsets = [0, 256], sizes = [8, 128], strides = [1, 1]} : vector<8x384xf32> to vector<8x128xf32>
    %77 = vector.broadcast %15 : vector<1x128xf32> to vector<8x128xf32>
    %78 = arith.addf %76, %77 : vector<8x128xf32>
    %79 = arith.mulf %73, %78 : vector<8x128xf32>
    %80 = arith.addf %75, %79 : vector<8x128xf32>
    %81 = math.tanh %80 : vector<8x128xf32>
    %cst_27 = arith.constant 1.000000e+00 : f32
    %82 = vector.broadcast %cst_27 : f32 to vector<8x128xf32>
    %83 = arith.subf %82, %74 : vector<8x128xf32>
    %84 = arith.mulf %83, %81 : vector<8x128xf32>
    %85 = arith.mulf %74, %60 : vector<8x128xf32>
    %86 = arith.addf %84, %85 : vector<8x128xf32>
    %cst_28 = arith.constant dense<0.000000e+00> : vector<8x384xf32>
    %87 = tpu.matmul %86, %14, %cst_28 {dimension_numbers = #tpu.dot_dimension_numbers<[1], [0], [0], [1], [0, 0, 1, 1], [], []>} : vector<8x128xf32>, vector<128x384xf32>, vector<8x384xf32> -> vector<8x384xf32>
    %88 = vector.extract_strided_slice %13 {offsets = [24, 0], sizes = [8, 384], strides = [1, 1]} : vector<64x384xf32> to vector<8x384xf32>
    %89 = vector.extract_strided_slice %88 {offsets = [0, 0], sizes = [8, 256], strides = [1, 1]} : vector<8x384xf32> to vector<8x256xf32>
    %90 = vector.extract_strided_slice %87 {offsets = [0, 0], sizes = [8, 256], strides = [1, 1]} : vector<8x384xf32> to vector<8x256xf32>
    %91 = arith.addf %89, %90 : vector<8x256xf32>
    %cst_29 = arith.constant 0.000000e+00 : f32
    %92 = vector.broadcast %cst_29 : f32 to vector<8x256xf32>
    %93 = arith.subf %92, %91 : vector<8x256xf32>
    %94 = math.exp %93 : vector<8x256xf32>
    %cst_30 = arith.constant 1.000000e+00 : f32
    %95 = vector.broadcast %cst_30 : f32 to vector<8x256xf32>
    %96 = arith.addf %95, %94 : vector<8x256xf32>
    %cst_31 = arith.constant 1.000000e+00 : f32
    %97 = vector.broadcast %cst_31 : f32 to vector<8x256xf32>
    %98 = arith.divf %97, %96 : vector<8x256xf32>
    %99 = vector.extract_strided_slice %98 {offsets = [0, 0], sizes = [8, 128], strides = [1, 1]} : vector<8x256xf32> to vector<8x128xf32>
    %100 = vector.extract_strided_slice %98 {offsets = [0, 128], sizes = [8, 128], strides = [1, 1]} : vector<8x256xf32> to vector<8x128xf32>
    %101 = vector.extract_strided_slice %88 {offsets = [0, 256], sizes = [8, 128], strides = [1, 1]} : vector<8x384xf32> to vector<8x128xf32>
    %102 = vector.extract_strided_slice %87 {offsets = [0, 256], sizes = [8, 128], strides = [1, 1]} : vector<8x384xf32> to vector<8x128xf32>
    %103 = vector.broadcast %15 : vector<1x128xf32> to vector<8x128xf32>
    %104 = arith.addf %102, %103 : vector<8x128xf32>
    %105 = arith.mulf %99, %104 : vector<8x128xf32>
    %106 = arith.addf %101, %105 : vector<8x128xf32>
    %107 = math.tanh %106 : vector<8x128xf32>
    %cst_32 = arith.constant 1.000000e+00 : f32
    %108 = vector.broadcast %cst_32 : f32 to vector<8x128xf32>
    %109 = arith.subf %108, %100 : vector<8x128xf32>
    %110 = arith.mulf %109, %107 : vector<8x128xf32>
    %111 = arith.mulf %100, %86 : vector<8x128xf32>
    %112 = arith.addf %110, %111 : vector<8x128xf32>
    %cst_33 = arith.constant dense<0.000000e+00> : vector<8x384xf32>
    %113 = tpu.matmul %112, %14, %cst_33 {dimension_numbers = #tpu.dot_dimension_numbers<[1], [0], [0], [1], [0, 0, 1, 1], [], []>} : vector<8x128xf32>, vector<128x384xf32>, vector<8x384xf32> -> vector<8x384xf32>
    %114 = vector.extract_strided_slice %13 {offsets = [32, 0], sizes = [8, 384], strides = [1, 1]} : vector<64x384xf32> to vector<8x384xf32>
    %115 = vector.extract_strided_slice %114 {offsets = [0, 0], sizes = [8, 256], strides = [1, 1]} : vector<8x384xf32> to vector<8x256xf32>
    %116 = vector.extract_strided_slice %113 {offsets = [0, 0], sizes = [8, 256], strides = [1, 1]} : vector<8x384xf32> to vector<8x256xf32>
    %117 = arith.addf %115, %116 : vector<8x256xf32>
    %cst_34 = arith.constant 0.000000e+00 : f32
    %118 = vector.broadcast %cst_34 : f32 to vector<8x256xf32>
    %119 = arith.subf %118, %117 : vector<8x256xf32>
    %120 = math.exp %119 : vector<8x256xf32>
    %cst_35 = arith.constant 1.000000e+00 : f32
    %121 = vector.broadcast %cst_35 : f32 to vector<8x256xf32>
    %122 = arith.addf %121, %120 : vector<8x256xf32>
    %cst_36 = arith.constant 1.000000e+00 : f32
    %123 = vector.broadcast %cst_36 : f32 to vector<8x256xf32>
    %124 = arith.divf %123, %122 : vector<8x256xf32>
    %125 = vector.extract_strided_slice %124 {offsets = [0, 0], sizes = [8, 128], strides = [1, 1]} : vector<8x256xf32> to vector<8x128xf32>
    %126 = vector.extract_strided_slice %124 {offsets = [0, 128], sizes = [8, 128], strides = [1, 1]} : vector<8x256xf32> to vector<8x128xf32>
    %127 = vector.extract_strided_slice %114 {offsets = [0, 256], sizes = [8, 128], strides = [1, 1]} : vector<8x384xf32> to vector<8x128xf32>
    %128 = vector.extract_strided_slice %113 {offsets = [0, 256], sizes = [8, 128], strides = [1, 1]} : vector<8x384xf32> to vector<8x128xf32>
    %129 = vector.broadcast %15 : vector<1x128xf32> to vector<8x128xf32>
    %130 = arith.addf %128, %129 : vector<8x128xf32>
    %131 = arith.mulf %125, %130 : vector<8x128xf32>
    %132 = arith.addf %127, %131 : vector<8x128xf32>
    %133 = math.tanh %132 : vector<8x128xf32>
    %cst_37 = arith.constant 1.000000e+00 : f32
    %134 = vector.broadcast %cst_37 : f32 to vector<8x128xf32>
    %135 = arith.subf %134, %126 : vector<8x128xf32>
    %136 = arith.mulf %135, %133 : vector<8x128xf32>
    %137 = arith.mulf %126, %112 : vector<8x128xf32>
    %138 = arith.addf %136, %137 : vector<8x128xf32>
    %cst_38 = arith.constant dense<0.000000e+00> : vector<8x384xf32>
    %139 = tpu.matmul %138, %14, %cst_38 {dimension_numbers = #tpu.dot_dimension_numbers<[1], [0], [0], [1], [0, 0, 1, 1], [], []>} : vector<8x128xf32>, vector<128x384xf32>, vector<8x384xf32> -> vector<8x384xf32>
    %140 = vector.extract_strided_slice %13 {offsets = [40, 0], sizes = [8, 384], strides = [1, 1]} : vector<64x384xf32> to vector<8x384xf32>
    %141 = vector.extract_strided_slice %140 {offsets = [0, 0], sizes = [8, 256], strides = [1, 1]} : vector<8x384xf32> to vector<8x256xf32>
    %142 = vector.extract_strided_slice %139 {offsets = [0, 0], sizes = [8, 256], strides = [1, 1]} : vector<8x384xf32> to vector<8x256xf32>
    %143 = arith.addf %141, %142 : vector<8x256xf32>
    %cst_39 = arith.constant 0.000000e+00 : f32
    %144 = vector.broadcast %cst_39 : f32 to vector<8x256xf32>
    %145 = arith.subf %144, %143 : vector<8x256xf32>
    %146 = math.exp %145 : vector<8x256xf32>
    %cst_40 = arith.constant 1.000000e+00 : f32
    %147 = vector.broadcast %cst_40 : f32 to vector<8x256xf32>
    %148 = arith.addf %147, %146 : vector<8x256xf32>
    %cst_41 = arith.constant 1.000000e+00 : f32
    %149 = vector.broadcast %cst_41 : f32 to vector<8x256xf32>
    %150 = arith.divf %149, %148 : vector<8x256xf32>
    %151 = vector.extract_strided_slice %150 {offsets = [0, 0], sizes = [8, 128], strides = [1, 1]} : vector<8x256xf32> to vector<8x128xf32>
    %152 = vector.extract_strided_slice %150 {offsets = [0, 128], sizes = [8, 128], strides = [1, 1]} : vector<8x256xf32> to vector<8x128xf32>
    %153 = vector.extract_strided_slice %140 {offsets = [0, 256], sizes = [8, 128], strides = [1, 1]} : vector<8x384xf32> to vector<8x128xf32>
    %154 = vector.extract_strided_slice %139 {offsets = [0, 256], sizes = [8, 128], strides = [1, 1]} : vector<8x384xf32> to vector<8x128xf32>
    %155 = vector.broadcast %15 : vector<1x128xf32> to vector<8x128xf32>
    %156 = arith.addf %154, %155 : vector<8x128xf32>
    %157 = arith.mulf %151, %156 : vector<8x128xf32>
    %158 = arith.addf %153, %157 : vector<8x128xf32>
    %159 = math.tanh %158 : vector<8x128xf32>
    %cst_42 = arith.constant 1.000000e+00 : f32
    %160 = vector.broadcast %cst_42 : f32 to vector<8x128xf32>
    %161 = arith.subf %160, %152 : vector<8x128xf32>
    %162 = arith.mulf %161, %159 : vector<8x128xf32>
    %163 = arith.mulf %152, %138 : vector<8x128xf32>
    %164 = arith.addf %162, %163 : vector<8x128xf32>
    %cst_43 = arith.constant dense<0.000000e+00> : vector<8x384xf32>
    %165 = tpu.matmul %164, %14, %cst_43 {dimension_numbers = #tpu.dot_dimension_numbers<[1], [0], [0], [1], [0, 0, 1, 1], [], []>} : vector<8x128xf32>, vector<128x384xf32>, vector<8x384xf32> -> vector<8x384xf32>
    %166 = vector.extract_strided_slice %13 {offsets = [48, 0], sizes = [8, 384], strides = [1, 1]} : vector<64x384xf32> to vector<8x384xf32>
    %167 = vector.extract_strided_slice %166 {offsets = [0, 0], sizes = [8, 256], strides = [1, 1]} : vector<8x384xf32> to vector<8x256xf32>
    %168 = vector.extract_strided_slice %165 {offsets = [0, 0], sizes = [8, 256], strides = [1, 1]} : vector<8x384xf32> to vector<8x256xf32>
    %169 = arith.addf %167, %168 : vector<8x256xf32>
    %cst_44 = arith.constant 0.000000e+00 : f32
    %170 = vector.broadcast %cst_44 : f32 to vector<8x256xf32>
    %171 = arith.subf %170, %169 : vector<8x256xf32>
    %172 = math.exp %171 : vector<8x256xf32>
    %cst_45 = arith.constant 1.000000e+00 : f32
    %173 = vector.broadcast %cst_45 : f32 to vector<8x256xf32>
    %174 = arith.addf %173, %172 : vector<8x256xf32>
    %cst_46 = arith.constant 1.000000e+00 : f32
    %175 = vector.broadcast %cst_46 : f32 to vector<8x256xf32>
    %176 = arith.divf %175, %174 : vector<8x256xf32>
    %177 = vector.extract_strided_slice %176 {offsets = [0, 0], sizes = [8, 128], strides = [1, 1]} : vector<8x256xf32> to vector<8x128xf32>
    %178 = vector.extract_strided_slice %176 {offsets = [0, 128], sizes = [8, 128], strides = [1, 1]} : vector<8x256xf32> to vector<8x128xf32>
    %179 = vector.extract_strided_slice %166 {offsets = [0, 256], sizes = [8, 128], strides = [1, 1]} : vector<8x384xf32> to vector<8x128xf32>
    %180 = vector.extract_strided_slice %165 {offsets = [0, 256], sizes = [8, 128], strides = [1, 1]} : vector<8x384xf32> to vector<8x128xf32>
    %181 = vector.broadcast %15 : vector<1x128xf32> to vector<8x128xf32>
    %182 = arith.addf %180, %181 : vector<8x128xf32>
    %183 = arith.mulf %177, %182 : vector<8x128xf32>
    %184 = arith.addf %179, %183 : vector<8x128xf32>
    %185 = math.tanh %184 : vector<8x128xf32>
    %cst_47 = arith.constant 1.000000e+00 : f32
    %186 = vector.broadcast %cst_47 : f32 to vector<8x128xf32>
    %187 = arith.subf %186, %178 : vector<8x128xf32>
    %188 = arith.mulf %187, %185 : vector<8x128xf32>
    %189 = arith.mulf %178, %164 : vector<8x128xf32>
    %190 = arith.addf %188, %189 : vector<8x128xf32>
    %cst_48 = arith.constant dense<0.000000e+00> : vector<8x384xf32>
    %191 = tpu.matmul %190, %14, %cst_48 {dimension_numbers = #tpu.dot_dimension_numbers<[1], [0], [0], [1], [0, 0, 1, 1], [], []>} : vector<8x128xf32>, vector<128x384xf32>, vector<8x384xf32> -> vector<8x384xf32>
    %192 = vector.extract_strided_slice %13 {offsets = [56, 0], sizes = [8, 384], strides = [1, 1]} : vector<64x384xf32> to vector<8x384xf32>
    %193 = vector.extract_strided_slice %192 {offsets = [0, 0], sizes = [8, 256], strides = [1, 1]} : vector<8x384xf32> to vector<8x256xf32>
    %194 = vector.extract_strided_slice %191 {offsets = [0, 0], sizes = [8, 256], strides = [1, 1]} : vector<8x384xf32> to vector<8x256xf32>
    %195 = arith.addf %193, %194 : vector<8x256xf32>
    %cst_49 = arith.constant 0.000000e+00 : f32
    %196 = vector.broadcast %cst_49 : f32 to vector<8x256xf32>
    %197 = arith.subf %196, %195 : vector<8x256xf32>
    %198 = math.exp %197 : vector<8x256xf32>
    %cst_50 = arith.constant 1.000000e+00 : f32
    %199 = vector.broadcast %cst_50 : f32 to vector<8x256xf32>
    %200 = arith.addf %199, %198 : vector<8x256xf32>
    %cst_51 = arith.constant 1.000000e+00 : f32
    %201 = vector.broadcast %cst_51 : f32 to vector<8x256xf32>
    %202 = arith.divf %201, %200 : vector<8x256xf32>
    %203 = vector.extract_strided_slice %202 {offsets = [0, 0], sizes = [8, 128], strides = [1, 1]} : vector<8x256xf32> to vector<8x128xf32>
    %204 = vector.extract_strided_slice %202 {offsets = [0, 128], sizes = [8, 128], strides = [1, 1]} : vector<8x256xf32> to vector<8x128xf32>
    %205 = vector.extract_strided_slice %192 {offsets = [0, 256], sizes = [8, 128], strides = [1, 1]} : vector<8x384xf32> to vector<8x128xf32>
    %206 = vector.extract_strided_slice %191 {offsets = [0, 256], sizes = [8, 128], strides = [1, 1]} : vector<8x384xf32> to vector<8x128xf32>
    %207 = vector.broadcast %15 : vector<1x128xf32> to vector<8x128xf32>
    %208 = arith.addf %206, %207 : vector<8x128xf32>
    %209 = arith.mulf %203, %208 : vector<8x128xf32>
    %210 = arith.addf %205, %209 : vector<8x128xf32>
    %211 = math.tanh %210 : vector<8x128xf32>
    %cst_52 = arith.constant 1.000000e+00 : f32
    %212 = vector.broadcast %cst_52 : f32 to vector<8x128xf32>
    %213 = arith.subf %212, %204 : vector<8x128xf32>
    %214 = arith.mulf %213, %211 : vector<8x128xf32>
    %215 = arith.mulf %204, %190 : vector<8x128xf32>
    %216 = arith.addf %214, %215 : vector<8x128xf32>
    %217 = vector.extract_strided_slice %216 {offsets = [0, 0], sizes = [8, 32], strides = [1, 1]} : vector<8x128xf32> to vector<8x32xf32>
    %c0_53 = arith.constant 0 : index
    %c0_54 = arith.constant 0 : index
    %218 = vector.load %arg6[%c0_53, %c0_54] : memref<8x32xf32, #tpu.memory_space<vmem>>, vector<8x32xf32>
    tpu.vector_store %arg6[%c0_53, %c0_54], %217 {strides = array<i32>} : memref<8x32xf32, #tpu.memory_space<vmem>>, vector<8x32xf32>,
    return
  }
}

</mosaic_0001>

<llo_original>
// kernel: question_module_forward.1
$region0: #{question_module_forward.1}
  #allocation0 [shape = 'u32[]', space=smem, size = 0x4, offset = 0x4, fixed_abs, tag = 'smem constant byte address 0x4 - core index']
  #allocation1 [shape = 'u32[144,128]{1,0:T(1,128)}', space=vmem, size = 0x12000, scoped, tag = 'internal scratch']
  %s0 = inlined_call_operand.vmem [shape: s32[64,1], index: 0, kind: input, shape index: {}]
  %s1 = inlined_call_operand.vmem [shape: f32[56,32], index: 1, kind: input, shape index: {}]
  %s2 = inlined_call_operand.vmem [shape: f32[32,384], index: 2, kind: input, shape index: {}]
  %s3 = inlined_call_operand.hbm [shape: f32[128,384], index: 3, kind: input, shape index: {}]
  %s4 = inlined_call_operand.vmem [shape: f32[1,384], index: 4, kind: input, shape index: {}]
  %s5 = inlined_call_operand.vmem [shape: f32[1,128], index: 5, kind: input, shape index: {}]
  %s6 = inlined_call_operand.vmem [shape: f32[8,32], index: 6, kind: output, shape index: {}]
  %s7 = sld [smem:[#allocation0]]
  $region38: #{question_module_forward.1} parent=0
    _
  %s9 = ssub.s32 1, %s7
  %s10 = scalar_select 0, %s9, %s7
  $region1: #{question_module_forward.1} parent=0
    #allocation2 [shape = 'u8[196608]{0}', space=vmem, size = 0x30000, scoped, tag = 'input window, operand 3, single buffered']
    #allocation3 [shape = 's32[1]{0}', space=sflag, size = 0x4, scoped, tag = 'scoped memory for question_module_forward.1']
    %11 = vsyncpa [#allocation3], 0
    // Predicated region
    $region2: #{question_module_forward.1} parent=1 // pred_check
      _
    $region3: #{question_module_forward.1} parent=1 // pred_check_branch
      %13 = sbr.rel (0) target = $region5
    $region4: #{question_module_forward.1} parent=1 // pred_region
      _
    $region5: #{question_module_forward.1} parent=1 // pred_fallthru
      _
    // Predicated region
    $region6: #{question_module_forward.1} parent=1 // pred_check
      _
    $region7: #{question_module_forward.1} parent=1 // pred_check_branch
      %15 = sbr.rel (0) target = $region9
    $region8: #{question_module_forward.1} parent=1 // pred_region
      _
    $region9: #{question_module_forward.1} parent=1 // pred_fallthru
      _
    // Predicated region
    $region10: #{question_module_forward.1} parent=1 // pred_check
      _
    $region11: #{question_module_forward.1} parent=1 // pred_check_branch
      %17 = sbr.rel (0) target = $region13
    $region12: #{question_module_forward.1} parent=1 // pred_region
      _
    $region13: #{question_module_forward.1} parent=1 // pred_fallthru
      _
    // Predicated region
    $region14: #{question_module_forward.1} parent=1 // pred_check
      _
    $region15: #{question_module_forward.1} parent=1 // pred_check_branch
      %19 = sbr.rel (0) target = $region17
    $region16: #{question_module_forward.1} parent=1 // pred_region
      %s21 = ssub.s32 6144, 6144
      %22 = vsyncadd [#allocation3], %s21
      %s23 = sshll.u32 [#allocation2], 4
      %s24 = int_to_ptr.vmem [resolvable:$true] %s23
      %29 = dma.hbm_to_vmem [thread:$0]  %s3, 6144, %s24, [#allocation3], 384, 384, 24
    $region17: #{question_module_forward.1} parent=1 // pred_fallthru
      _
    // Predicated region
    $region18: #{question_module_forward.1} parent=1 // pred_check
      _
    $region19: #{question_module_forward.1} parent=1 // pred_check_branch
      %31 = sbr.rel (0) target = $region21
    $region20: #{question_module_forward.1} parent=1 // pred_region
      _
    $region21: #{question_module_forward.1} parent=1 // pred_fallthru
      _
    // Predicated region
    $region22: #{question_module_forward.1} parent=1 // pred_check
      _
    $region23: #{question_module_forward.1} parent=1 // pred_check_branch
      %33 = sbr.rel (0) target = $region25
    $region24: #{question_module_forward.1} parent=1 // pred_region
      _
    $region25: #{question_module_forward.1} parent=1 // pred_fallthru
      _
    // Predicated region
    $region26: #{question_module_forward.1} parent=1 // pred_check
      _
    $region27: #{question_module_forward.1} parent=1 // pred_check_branch
      %35 = sbr.rel (0) target = $region29
    $region28: #{question_module_forward.1} parent=1 // pred_region
      %36 = dma.done [#allocation3], 6144
    $region29: #{question_module_forward.1} parent=1 // pred_fallthru
      _
    %v37 = vld [vmem:[%s0] sm:$0xff]
    %v38 = vld [vmem:[%s0 + $0x8] sm:$0xff]
    %v39 = vld [vmem:[%s0 + $0x10] sm:$0xff]
    %v40 = vld [vmem:[%s0 + $0x18] sm:$0xff]
    %v41 = vld [vmem:[%s0 + $0x20] sm:$0xff]
    %v42 = vld [vmem:[%s0 + $0x28] sm:$0xff]
    %v43 = vld [vmem:[%s0 + $0x30] sm:$0xff]
    %v44 = vld [vmem:[%s0 + $0x38] sm:$0xff]
    %v45 = vlaneseq
    %v46 = vand.u32 %v45, 127
    %47 = vset.pattern.permute.xlu0 0
    %48 = vperm.xlu0 %47, %v37
    %v49 = vpop.permute.xlu0 %48
    %50 = vset.pattern.permute.xlu0 0
    %51 = vperm.xlu0 %50, %v38
    %v52 = vpop.permute.xlu0 %51
    %53 = vset.pattern.permute.xlu0 0
    %54 = vperm.xlu0 %53, %v39
    %v55 = vpop.permute.xlu0 %54
    %56 = vset.pattern.permute.xlu0 0
    %57 = vperm.xlu0 %56, %v40
    %v58 = vpop.permute.xlu0 %57
    %59 = vset.pattern.permute.xlu0 0
    %60 = vperm.xlu0 %59, %v41
    %v61 = vpop.permute.xlu0 %60
    %62 = vset.pattern.permute.xlu0 0
    %63 = vperm.xlu0 %62, %v42
    %v64 = vpop.permute.xlu0 %63
    %65 = vset.pattern.permute.xlu0 0
    %66 = vperm.xlu0 %65, %v43
    %v67 = vpop.permute.xlu0 %66
    %68 = vset.pattern.permute.xlu0 0
    %69 = vperm.xlu0 %68, %v44
    %v70 = vpop.permute.xlu0 %69
    %vm71 = vcmp.eq.s32.totalorder %v49, %v46
    %vm72 = vcmp.eq.s32.totalorder %v52, %v46
    %vm73 = vcmp.eq.s32.totalorder %v55, %v46
    %vm74 = vcmp.eq.s32.totalorder %v58, %v46
    %vm75 = vcmp.eq.s32.totalorder %v61, %v46
    %vm76 = vcmp.eq.s32.totalorder %v64, %v46
    %vm77 = vcmp.eq.s32.totalorder %v67, %v46
    %vm78 = vcmp.eq.s32.totalorder %v70, %v46
    %v79 = vsel %vm71, 1.0, 0.0
    %v80 = vsel %vm72, 1.0, 0.0
    %v81 = vsel %vm73, 1.0, 0.0
    %v82 = vsel %vm74, 1.0, 0.0
    %v83 = vsel %vm75, 1.0, 0.0
    %v84 = vsel %vm76, 1.0, 0.0
    %v85 = vsel %vm77, 1.0, 0.0
    %v86 = vsel %vm78, 1.0, 0.0
    %v87 = vld [vmem:[%s1] sm:$0xff]
    %v88 = vld [vmem:[%s1 + $0x8] sm:$0xff]
    %v89 = vld [vmem:[%s1 + $0x10] sm:$0xff]
    %v90 = vld [vmem:[%s1 + $0x18] sm:$0xff]
    %v91 = vld [vmem:[%s1 + $0x20] sm:$0xff]
    %v92 = vld [vmem:[%s1 + $0x28] sm:$0xff]
    %v93 = vld [vmem:[%s1 + $0x30] sm:$0xff]
    %vm94 = vcmask 457728
    %v96 = vsel %vm94, %v79, 0
    %v99 = vsel %vm94, %v80, 0
    %v102 = vsel %vm94, %v81, 0
    %v105 = vsel %vm94, %v82, 0
    %v108 = vsel %vm94, %v83, 0
    %v111 = vsel %vm94, %v84, 0
    %v114 = vsel %vm94, %v85, 0
    %v117 = vsel %vm94, %v86, 0
    %119 = vmatprep.subr.mxu0 0.0
    %120 = vmatpush1.msra.mxu0 %v87
    %121 = vmatprep.subr.mxu0 0.0
    %122 = vmatpush1.msra.mxu0 %v88
    %123 = vmatprep.subr.mxu0 0.0
    %124 = vmatpush1.msra.mxu0 %v89
    %125 = vmatprep.subr.mxu0 0.0
    %126 = vmatpush1.msra.mxu0 %v90
    %127 = vmatprep.subr.mxu0 0.0
    %128 = vmatpush1.msra.mxu0 %v91
    %129 = vmatprep.subr.mxu0 0.0
    %130 = vmatpush1.msra.mxu0 %v92
    %131 = vmatprep.subr.mxu0 0.0
    %132 = vmatpush1.msra.mxu0 %v93
    %133 = vmatprep.subr.mxu0 0.0
    %134 = vmatpush1.msra.mxu0 0.0
    %135 = vmatprep.subr.mxu0 0.0
    %136 = vmatpush1.msra.mxu0 0.0
    %137 = vmatprep.subr.mxu0 0.0
    %138 = vmatpush1.msra.mxu0 0.0
    %139 = vmatprep.subr.mxu0 0.0
    %140 = vmatpush1.msra.mxu0 0.0
    %141 = vmatprep.subr.mxu0 0.0
    %142 = vmatpush1.msra.mxu0 0.0
    %143 = vmatprep.subr.mxu0 0.0
    %144 = vmatpush1.msra.mxu0 0.0
    %145 = vmatprep.subr.mxu0 0.0
    %146 = vmatpush1.msra.mxu0 0.0
    %147 = vmatprep.subr.mxu0 0.0
    %148 = vmatpush1.msra.mxu0 0.0
    %149 = vmatprep.subr.mxu0 0.0
    %150 = vmatpush1.msra.mxu0 0.0
    %151 = vmatprep.subr.mxu0 0.0
    %152 = vmatpush1.msra.mxu0 0.0
    %153 = vmatprep.subr.mxu0 0.0
    %154 = vmatpush1.msra.mxu0 0.0
    %155 = vmatprep.subr.mxu0 0.0
    %156 = vmatpush1.msra.mxu0 0.0
    %157 = vmatprep.subr.mxu0 0.0
    %158 = vmatpush1.msra.mxu0 0.0
    %159 = vmatprep.subr.mxu0 0.0
    %160 = vmatpush1.msra.mxu0 0.0
    %161 = vmatprep.subr.mxu0 0.0
    %162 = vmatpush1.msra.mxu0 0.0
    %163 = vmatprep.subr.mxu0 0.0
    %164 = vmatpush1.msra.mxu0 0.0
    %165 = vmatprep.subr.mxu0 0.0
    %166 = vmatpush1.msra.mxu0 0.0
    %167 = vmatprep.subr.mxu0 0.0
    %168 = vmatpush1.msra.mxu0 0.0
    %169 = vmatprep.subr.mxu0 0.0
    %170 = vmatpush1.msra.mxu0 0.0
    %171 = vmatprep.subr.mxu0 0.0
    %172 = vmatpush1.msra.mxu0 0.0
    %173 = vmatprep.subr.mxu0 0.0
    %174 = vmatpush1.msra.mxu0 0.0
    %175 = vmatprep.subr.mxu0 0.0
    %176 = vmatpush1.msra.mxu0 0.0
    %177 = vmatprep.subr.mxu0 0.0
    %178 = vmatpush1.msra.mxu0 0.0
    %179 = vmatprep.subr.mxu0 0.0
    %180 = vmatpush1.msra.mxu0 0.0
    %181 = vmatprep.subr.mxu0 0.0
    %182 = vmatpush1.msra.mxu0 0.0
    %183 = vmatprep.mubr.f32.mxu0 0.0
    %184 = vmatmul.mubr.f32.gmra.mrb[0].mxu0 %v96
    %v185 = vpop.f32.mrb[0].mxu0
    %v186 = vadd.f32 0.0, %v185
    %v187 = vpop.f32.mrb[0].mxu0
    %188 = vmatprep.mubr.f32.mxu0 0.0
    %189 = vmatmul.mubr.f32.gmra.mrb[0].mxu0 %v99
    %v190 = vpop.f32.mrb[0].mxu0
    %v191 = vadd.f32 0.0, %v190
    %v192 = vpop.f32.mrb[0].mxu0
    %193 = vmatprep.mubr.f32.mxu0 0.0
    %194 = vmatmul.mubr.f32.gmra.mrb[0].mxu0 %v102
    %v195 = vpop.f32.mrb[0].mxu0
    %v196 = vadd.f32 0.0, %v195
    %v197 = vpop.f32.mrb[0].mxu0
    %198 = vmatprep.mubr.f32.mxu0 0.0
    %199 = vmatmul.mubr.f32.gmra.mrb[0].mxu0 %v105
    %v200 = vpop.f32.mrb[0].mxu0
    %v201 = vadd.f32 0.0, %v200
    %v202 = vpop.f32.mrb[0].mxu0
    %203 = vmatprep.mubr.f32.mxu0 0.0
    %204 = vmatmul.mubr.f32.gmra.mrb[0].mxu0 %v108
    %v205 = vpop.f32.mrb[0].mxu0
    %v206 = vadd.f32 0.0, %v205
    %v207 = vpop.f32.mrb[0].mxu0
    %208 = vmatprep.mubr.f32.mxu0 0.0
    %209 = vmatmul.mubr.f32.gmra.mrb[0].mxu0 %v111
    %v210 = vpop.f32.mrb[0].mxu0
    %v211 = vadd.f32 0.0, %v210
    %v212 = vpop.f32.mrb[0].mxu0
    %213 = vmatprep.mubr.f32.mxu0 0.0
    %214 = vmatmul.mubr.f32.gmra.mrb[0].mxu0 %v114
    %v215 = vpop.f32.mrb[0].mxu0
    %v216 = vadd.f32 0.0, %v215
    %v217 = vpop.f32.mrb[0].mxu0
    %218 = vmatprep.mubr.f32.mxu0 0.0
    %219 = vmatmul.mubr.f32.gmra.mrb[0].mxu0 %v117
    %v220 = vpop.f32.mrb[0].mxu0
    %v221 = vadd.f32 0.0, %v220
    %v222 = vpop.f32.mrb[0].mxu0
    %223 = vdwg.mxu0
    %v224 = vld [vmem:[%s2] sm:$0xff]
    %v225 = vld [vmem:[%s2 + $0x8] sm:$0xff]
    %v226 = vld [vmem:[%s2 + $0x10] sm:$0xff]
    %v227 = vld [vmem:[%s2 + $0x18] sm:$0xff]
    %v228 = vld [vmem:[%s2 + $0x20] sm:$0xff]
    %v229 = vld [vmem:[%s2 + $0x28] sm:$0xff]
    %v230 = vld [vmem:[%s2 + $0x30] sm:$0xff]
    %v231 = vld [vmem:[%s2 + $0x38] sm:$0xff]
    %v232 = vld [vmem:[%s2 + $0x40] sm:$0xff]
    %v233 = vld [vmem:[%s2 + $0x48] sm:$0xff]
    %v234 = vld [vmem:[%s2 + $0x50] sm:$0xff]
    %v235 = vld [vmem:[%s2 + $0x58] sm:$0xff]
    %v236 = vld [vmem:[%s4] sm:$0x7]
    %v238 = vlaneseq
    %v239 = vshrl.u32 %v238, 7
    %v240 = vsub.s32 0, %v239
    %v241 = vrot.slane %v236, %v240
    %v242 = vlaneseq
    %v243 = vshrl.u32 %v242, 7
    %v244 = vsub.s32 1, %v243
    %v245 = vrot.slane %v236, %v244
    %v246 = vlaneseq
    %v247 = vshrl.u32 %v246, 7
    %v248 = vsub.s32 2, %v247
    %v249 = vrot.slane %v236, %v248
    %vm253 = vcmask 261120
    %v255 = vsel %vm253, %v186, 0
    %v258 = vsel %vm253, %v191, 0
    %v261 = vsel %vm253, %v196, 0
    %v264 = vsel %vm253, %v201, 0
    %v267 = vsel %vm253, %v206, 0
    %v270 = vsel %vm253, %v211, 0
    %v273 = vsel %vm253, %v216, 0
    %v276 = vsel %vm253, %v221, 0
    %278 = vmatprep.subr.mxu0 %v225
    %279 = vmatpush1.msra.mxu0 %v224
    %280 = vmatprep.subr.mxu0 %v228
    %281 = vmatpush1.msra.mxu0 %v227
    %282 = vmatprep.subr.mxu0 %v231
    %283 = vmatpush1.msra.mxu0 %v230
    %284 = vmatprep.subr.mxu0 %v234
    %285 = vmatpush1.msra.mxu0 %v233
    %286 = vmatprep.subr.mxu0 0.0
    %287 = vmatpush1.msra.mxu0 0.0
    %288 = vmatprep.subr.mxu0 0.0
    %289 = vmatpush1.msra.mxu0 0.0
    %290 = vmatprep.subr.mxu0 0.0
    %291 = vmatpush1.msra.mxu0 0.0
    %292 = vmatprep.subr.mxu0 0.0
    %293 = vmatpush1.msra.mxu0 0.0
    %294 = vmatprep.subr.mxu0 0.0
    %295 = vmatpush1.msra.mxu0 0.0
    %296 = vmatprep.subr.mxu0 0.0
    %297 = vmatpush1.msra.mxu0 0.0
    %298 = vmatprep.subr.mxu0 0.0
    %299 = vmatpush1.msra.mxu0 0.0
    %300 = vmatprep.subr.mxu0 0.0
    %301 = vmatpush1.msra.mxu0 0.0
    %302 = vmatprep.subr.mxu0 0.0
    %303 = vmatpush1.msra.mxu0 0.0
    %304 = vmatprep.subr.mxu0 0.0
    %305 = vmatpush1.msra.mxu0 0.0
    %306 = vmatprep.subr.mxu0 0.0
    %307 = vmatpush1.msra.mxu0 0.0
    %308 = vmatprep.subr.mxu0 0.0
    %309 = vmatpush1.msra.mxu0 0.0
    %310 = vmatprep.subr.mxu0 0.0
    %311 = vmatpush1.msra.mxu0 0.0
    %312 = vmatprep.subr.mxu0 0.0
    %313 = vmatpush1.msra.mxu0 0.0
    %314 = vmatprep.subr.mxu0 0.0
    %315 = vmatpush1.msra.mxu0 0.0
    %316 = vmatprep.subr.mxu0 0.0
    %317 = vmatpush1.msra.mxu0 0.0
    %318 = vmatprep.subr.mxu0 0.0
    %319 = vmatpush1.msra.mxu0 0.0
    %320 = vmatprep.subr.mxu0 0.0
    %321 = vmatpush1.msra.mxu0 0.0
    %322 = vmatprep.subr.mxu0 0.0
    %323 = vmatpush1.msra.mxu0 0.0
    %324 = vmatprep.subr.mxu0 0.0
    %325 = vmatpush1.msra.mxu0 0.0
    %326 = vmatprep.subr.mxu0 0.0
    %327 = vmatpush1.msra.mxu0 0.0
    %328 = vmatprep.subr.mxu0 0.0
    %329 = vmatpush1.msra.mxu0 0.0
    %330 = vmatprep.subr.mxu0 0.0
    %331 = vmatpush1.msra.mxu0 0.0
    %332 = vmatprep.subr.mxu0 0.0
    %333 = vmatpush1.msra.mxu0 0.0
    %334 = vmatprep.subr.mxu0 0.0
    %335 = vmatpush1.msra.mxu0 0.0
    %336 = vmatprep.subr.mxu0 0.0
    %337 = vmatpush1.msra.mxu0 0.0
    %338 = vmatprep.subr.mxu0 0.0
    %339 = vmatpush1.msra.mxu0 0.0
    %340 = vmatprep.subr.mxu0 0.0
    %341 = vmatpush1.msra.mxu0 0.0
    %342 = vmatprep.mubr.f32.mxu0 0.0
    %343 = vmatmul.mubr.f32.gmra.mrb[0].mxu0 %v255
    %v344 = vpop.f32.mrb[0].mxu0
    %v345 = vadd.f32 %v241, %v344
    %v346 = vpop.f32.mrb[0].mxu0
    %v347 = vadd.f32 %v245, %v346
    %348 = vmatprep.mubr.f32.mxu0 0.0
    %349 = vmatmul.mubr.f32.gmra.mrb[0].mxu0 %v258
    %v350 = vpop.f32.mrb[0].mxu0
    %v351 = vadd.f32 %v241, %v350
    %v352 = vpop.f32.mrb[0].mxu0
    %v353 = vadd.f32 %v245, %v352
    %354 = vmatprep.mubr.f32.mxu0 0.0
    %355 = vmatmul.mubr.f32.gmra.mrb[0].mxu0 %v261
    %v356 = vpop.f32.mrb[0].mxu0
    %v357 = vadd.f32 %v241, %v356
    %v358 = vpop.f32.mrb[0].mxu0
    %v359 = vadd.f32 %v245, %v358
    %360 = vmatprep.mubr.f32.mxu0 0.0
    %361 = vmatmul.mubr.f32.gmra.mrb[0].mxu0 %v264
    %v362 = vpop.f32.mrb[0].mxu0
    %v363 = vadd.f32 %v241, %v362
    %v364 = vpop.f32.mrb[0].mxu0
    %v365 = vadd.f32 %v245, %v364
    %366 = vmatprep.mubr.f32.mxu0 0.0
    %367 = vmatmul.mubr.f32.gmra.mrb[0].mxu0 %v267
    %v368 = vpop.f32.mrb[0].mxu0
    %v369 = vadd.f32 %v241, %v368
    %v370 = vpop.f32.mrb[0].mxu0
    %v371 = vadd.f32 %v245, %v370
    %372 = vmatprep.mubr.f32.mxu0 0.0
    %373 = vmatmul.mubr.f32.gmra.mrb[0].mxu0 %v270
    %v374 = vpop.f32.mrb[0].mxu0
    %v375 = vadd.f32 %v241, %v374
    %v376 = vpop.f32.mrb[0].mxu0
    %v377 = vadd.f32 %v245, %v376
    %378 = vmatprep.mubr.f32.mxu0 0.0
    %379 = vmatmul.mubr.f32.gmra.mrb[0].mxu0 %v273
    %v380 = vpop.f32.mrb[0].mxu0
    %v381 = vadd.f32 %v241, %v380
    %v382 = vpop.f32.mrb[0].mxu0
    %v383 = vadd.f32 %v245, %v382
    %384 = vmatprep.mubr.f32.mxu0 0.0
    %385 = vmatmul.mubr.f32.gmra.mrb[0].mxu0 %v276
    %v386 = vpop.f32.mrb[0].mxu0
    %v387 = vadd.f32 %v241, %v386
    %v388 = vpop.f32.mrb[0].mxu0
    %v389 = vadd.f32 %v245, %v388
    %390 = vdwg.mxu0
    %391 = vmatprep.subr.mxu0 0.0
    %392 = vmatpush1.msra.mxu0 %v226
    %393 = vmatprep.subr.mxu0 0.0
    %394 = vmatpush1.msra.mxu0 %v229
    %395 = vmatprep.subr.mxu0 0.0
    %396 = vmatpush1.msra.mxu0 %v232
    %397 = vmatprep.subr.mxu0 0.0
    %398 = vmatpush1.msra.mxu0 %v235
    %399 = vmatprep.subr.mxu0 0.0
    %400 = vmatpush1.msra.mxu0 0.0
    %401 = vmatprep.subr.mxu0 0.0
    %402 = vmatpush1.msra.mxu0 0.0
    %403 = vmatprep.subr.mxu0 0.0
    %404 = vmatpush1.msra.mxu0 0.0
    %405 = vmatprep.subr.mxu0 0.0
    %406 = vmatpush1.msra.mxu0 0.0
    %407 = vmatprep.subr.mxu0 0.0
    %408 = vmatpush1.msra.mxu0 0.0
    %409 = vmatprep.subr.mxu0 0.0
    %410 = vmatpush1.msra.mxu0 0.0
    %411 = vmatprep.subr.mxu0 0.0
    %412 = vmatpush1.msra.mxu0 0.0
    %413 = vmatprep.subr.mxu0 0.0
    %414 = vmatpush1.msra.mxu0 0.0
    %415 = vmatprep.subr.mxu0 0.0
    %416 = vmatpush1.msra.mxu0 0.0
    %417 = vmatprep.subr.mxu0 0.0
    %418 = vmatpush1.msra.mxu0 0.0
    %419 = vmatprep.subr.mxu0 0.0
    %420 = vmatpush1.msra.mxu0 0.0
    %421 = vmatprep.subr.mxu0 0.0
    %422 = vmatpush1.msra.mxu0 0.0
    %423 = vmatprep.subr.mxu0 0.0
    %424 = vmatpush1.msra.mxu0 0.0
    %425 = vmatprep.subr.mxu0 0.0
    %426 = vmatpush1.msra.mxu0 0.0
    %427 = vmatprep.subr.mxu0 0.0
    %428 = vmatpush1.msra.mxu0 0.0
    %429 = vmatprep.subr.mxu0 0.0
    %430 = vmatpush1.msra.mxu0 0.0
    %431 = vmatprep.subr.mxu0 0.0
    %432 = vmatpush1.msra.mxu0 0.0
    %433 = vmatprep.subr.mxu0 0.0
    %434 = vmatpush1.msra.mxu0 0.0
    %435 = vmatprep.subr.mxu0 0.0
    %436 = vmatpush1.msra.mxu0 0.0
    %437 = vmatprep.subr.mxu0 0.0
    %438 = vmatpush1.msra.mxu0 0.0
    %439 = vmatprep.subr.mxu0 0.0
    %440 = vmatpush1.msra.mxu0 0.0
    %441 = vmatprep.subr.mxu0 0.0
    %442 = vmatpush1.msra.mxu0 0.0
    %443 = vmatprep.subr.mxu0 0.0
    %444 = vmatpush1.msra.mxu0 0.0
    %445 = vmatprep.subr.mxu0 0.0
    %446 = vmatpush1.msra.mxu0 0.0
    %447 = vmatprep.subr.mxu0 0.0
    %448 = vmatpush1.msra.mxu0 0.0
    %449 = vmatprep.subr.mxu0 0.0
    %450 = vmatpush1.msra.mxu0 0.0
    %451 = vmatprep.subr.mxu0 0.0
    %452 = vmatpush1.msra.mxu0 0.0
    %453 = vmatprep.subr.mxu0 0.0
    %454 = vmatpush1.msra.mxu0 0.0
    %455 = vmatprep.mubr.f32.mxu0 0.0
    %456 = vmatmul.mubr.f32.gmra.mrb[0].mxu0 %v255
    %v457 = vpop.f32.mrb[0].mxu0
    %v458 = vadd.f32 %v249, %v457
    %v459 = vpop.f32.mrb[0].mxu0
    %460 = vmatprep.mubr.f32.mxu0 0.0
    %461 = vmatmul.mubr.f32.gmra.mrb[0].mxu0 %v258
    %v462 = vpop.f32.mrb[0].mxu0
    %v463 = vadd.f32 %v249, %v462
    %v464 = vpop.f32.mrb[0].mxu0
    %465 = vmatprep.mubr.f32.mxu0 0.0
    %466 = vmatmul.mubr.f32.gmra.mrb[0].mxu0 %v261
    %v467 = vpop.f32.mrb[0].mxu0
    %v468 = vadd.f32 %v249, %v467
    %v469 = vpop.f32.mrb[0].mxu0
    %470 = vmatprep.mubr.f32.mxu0 0.0
    %471 = vmatmul.mubr.f32.gmra.mrb[0].mxu0 %v264
    %v472 = vpop.f32.mrb[0].mxu0
    %v473 = vadd.f32 %v249, %v472
    %v474 = vpop.f32.mrb[0].mxu0
    %475 = vmatprep.mubr.f32.mxu0 0.0
    %476 = vmatmul.mubr.f32.gmra.mrb[0].mxu0 %v267
    %v477 = vpop.f32.mrb[0].mxu0
    %v478 = vadd.f32 %v249, %v477
    %v479 = vpop.f32.mrb[0].mxu0
    %480 = vmatprep.mubr.f32.mxu0 0.0
    %481 = vmatmul.mubr.f32.gmra.mrb[0].mxu0 %v270
    %v482 = vpop.f32.mrb[0].mxu0
    %v483 = vadd.f32 %v249, %v482
    %v484 = vpop.f32.mrb[0].mxu0
    %485 = vmatprep.mubr.f32.mxu0 0.0
    %486 = vmatmul.mubr.f32.gmra.mrb[0].mxu0 %v273
    %v487 = vpop.f32.mrb[0].mxu0
    %v488 = vadd.f32 %v249, %v487
    %v489 = vpop.f32.mrb[0].mxu0
    %490 = vmatprep.mubr.f32.mxu0 0.0
    %491 = vmatmul.mubr.f32.gmra.mrb[0].mxu0 %v276
    %v492 = vpop.f32.mrb[0].mxu0
    %v493 = vadd.f32 %v249, %v492
    %v494 = vpop.f32.mrb[0].mxu0
    %495 = vdwg.mxu0
    %v496 = vld [vmem:[#allocation2] sm:$0xff]
    %v497 = vld [vmem:[#allocation2 + $0x8] sm:$0xff]
    %v498 = vld [vmem:[#allocation2 + $0x10] sm:$0xff]
    %v499 = vld [vmem:[#allocation2 + $0x18] sm:$0xff]
    %v500 = vld [vmem:[#allocation2 + $0x20] sm:$0xff]
    %v501 = vld [vmem:[#allocation2 + $0x28] sm:$0xff]
    %v502 = vld [vmem:[#allocation2 + $0x30] sm:$0xff]
    %v503 = vld [vmem:[#allocation2 + $0x38] sm:$0xff]
    %v504 = vld [vmem:[#allocation2 + $0x40] sm:$0xff]
    %v505 = vld [vmem:[#allocation2 + $0x48] sm:$0xff]
    %v506 = vld [vmem:[#allocation2 + $0x50] sm:$0xff]
    %v507 = vld [vmem:[#allocation2 + $0x58] sm:$0xff]
    %v508 = vld [vmem:[#allocation2 + $0x60] sm:$0xff]
    %v509 = vld [vmem:[#allocation2 + $0x68] sm:$0xff]
    %v510 = vld [vmem:[#allocation2 + $0x70] sm:$0xff]
    %v511 = vld [vmem:[#allocation2 + $0x78] sm:$0xff]
    %v512 = vld [vmem:[#allocation2 + $0x80] sm:$0xff]
    %v513 = vld [vmem:[#allocation2 + $0x88] sm:$0xff]
    %v514 = vld [vmem:[#allocation2 + $0x90] sm:$0xff]
    %v515 = vld [vmem:[#allocation2 + $0x98] sm:$0xff]
    %v516 = vld [vmem:[#allocation2 + $0xa0] sm:$0xff]
    %v517 = vld [vmem:[#allocation2 + $0xa8] sm:$0xff]
    %v518 = vld [vmem:[#allocation2 + $0xb0] sm:$0xff]
    %v519 = vld [vmem:[#allocation2 + $0xb8] sm:$0xff]
    %v520 = vld [vmem:[#allocation2 + $0xc0] sm:$0xff]
    %v521 = vld [vmem:[#allocation2 + $0xc8] sm:$0xff]
    %v522 = vld [vmem:[#allocation2 + $0xd0] sm:$0xff]
    %v523 = vld [vmem:[#allocation2 + $0xd8] sm:$0xff]
    %v524 = vld [vmem:[#allocation2 + $0xe0] sm:$0xff]
    %v525 = vld [vmem:[#allocation2 + $0xe8] sm:$0xff]
    %v526 = vld [vmem:[#allocation2 + $0xf0] sm:$0xff]
    %v527 = vld [vmem:[#allocation2 + $0xf8] sm:$0xff]
    %v528 = vld [vmem:[#allocation2 + $0x100] sm:$0xff]
    %v529 = vld [vmem:[#allocation2 + $0x108] sm:$0xff]
    %v530 = vld [vmem:[#allocation2 + $0x110] sm:$0xff]
    %v531 = vld [vmem:[#allocation2 + $0x118] sm:$0xff]
    %v532 = vld [vmem:[#allocation2 + $0x120] sm:$0xff]
    %v533 = vld [vmem:[#allocation2 + $0x128] sm:$0xff]
    %v534 = vld [vmem:[#allocation2 + $0x130] sm:$0xff]
    %v535 = vld [vmem:[#allocation2 + $0x138] sm:$0xff]
    %v536 = vld [vmem:[#allocation2 + $0x140] sm:$0xff]
    %v537 = vld [vmem:[#allocation2 + $0x148] sm:$0xff]
    %v538 = vld [vmem:[#allocation2 + $0x150] sm:$0xff]
    %v539 = vld [vmem:[#allocation2 + $0x158] sm:$0xff]
    %v540 = vld [vmem:[#allocation2 + $0x160] sm:$0xff]
    %v541 = vld [vmem:[#allocation2 + $0x168] sm:$0xff]
    %v542 = vld [vmem:[#allocation2 + $0x170] sm:$0xff]
    %v543 = vld [vmem:[#allocation2 + $0x178] sm:$0xff]
    %v544 = vld [vmem:[%s5] sm:$0x1]
    %v545 = vsub.f32 0.0, %v345
    %v546 = vsub.f32 0.0, %v347
    %v547 = vmul.f32 %v545, 1.442695
    %v548 = vpow.pop %v547
    %v549 = vmul.f32 %v546, 1.442695
    %v550 = vpow.pop %v549
    %v551 = vadd.f32 %v548, 1.0
    %v552 = vadd.f32 %v550, 1.0
    %v553 = vrcp.pop %v551
    %v554 = vmul.f32 1.0, %v553
    %v555 = vrcp.pop %v552
    %v556 = vmul.f32 1.0, %v555
    %v558 = vlaneseq
    %v559 = vshrl.u32 %v558, 7
    %v560 = vsub.s32 0, %v559
    %v561 = vrot.slane %v544, %v560
    %v563 = vmul.f32 %v554, %v561
    %v564 = vadd.f32 %v458, %v563
    %v565 = vtanh.pop %v564
    %v566 = vsub.f32 1.0, %v556
    %v567 = vmul.f32 %v566, %v565
    %568 = vmatprep.subr.mxu0 %v497
    %569 = vmatpush1.msra.mxu0 %v496
    %570 = vmatprep.subr.mxu0 %v500
    %571 = vmatpush1.msra.mxu0 %v499
    %572 = vmatprep.subr.mxu0 %v503
    %573 = vmatpush1.msra.mxu0 %v502
    %574 = vmatprep.subr.mxu0 %v506
    %575 = vmatpush1.msra.mxu0 %v505
    %576 = vmatprep.subr.mxu0 %v509
    %577 = vmatpush1.msra.mxu0 %v508
    %578 = vmatprep.subr.mxu0 %v512
    %579 = vmatpush1.msra.mxu0 %v511
    %580 = vmatprep.subr.mxu0 %v515
    %581 = vmatpush1.msra.mxu0 %v514
    %582 = vmatprep.subr.mxu0 %v518
    %583 = vmatpush1.msra.mxu0 %v517
    %584 = vmatprep.subr.mxu0 %v521
    %585 = vmatpush1.msra.mxu0 %v520
    %586 = vmatprep.subr.mxu0 %v524
    %587 = vmatpush1.msra.mxu0 %v523
    %588 = vmatprep.subr.mxu0 %v527
    %589 = vmatpush1.msra.mxu0 %v526
    %590 = vmatprep.subr.mxu0 %v530
    %591 = vmatpush1.msra.mxu0 %v529
    %592 = vmatprep.subr.mxu0 %v533
    %593 = vmatpush1.msra.mxu0 %v532
    %594 = vmatprep.subr.mxu0 %v536
    %595 = vmatpush1.msra.mxu0 %v535
    %596 = vmatprep.subr.mxu0 %v539
    %597 = vmatpush1.msra.mxu0 %v538
    %598 = vmatprep.subr.mxu0 %v542
    %599 = vmatpush1.msra.mxu0 %v541
    %600 = vmatprep.subr.mxu0 0.0
    %601 = vmatpush1.msra.mxu0 0.0
    %602 = vmatprep.subr.mxu0 0.0
    %603 = vmatpush1.msra.mxu0 0.0
    %604 = vmatprep.subr.mxu0 0.0
    %605 = vmatpush1.msra.mxu0 0.0
    %606 = vmatprep.subr.mxu0 0.0
    %607 = vmatpush1.msra.mxu0 0.0
    %608 = vmatprep.subr.mxu0 0.0
    %609 = vmatpush1.msra.mxu0 0.0
    %610 = vmatprep.subr.mxu0 0.0
    %611 = vmatpush1.msra.mxu0 0.0
    %612 = vmatprep.subr.mxu0 0.0
    %613 = vmatpush1.msra.mxu0 0.0
    %614 = vmatprep.subr.mxu0 0.0
    %615 = vmatpush1.msra.mxu0 0.0
    %616 = vmatprep.subr.mxu0 0.0
    %617 = vmatpush1.msra.mxu0 0.0
    %618 = vmatprep.subr.mxu0 0.0
    %619 = vmatpush1.msra.mxu0 0.0
    %620 = vmatprep.subr.mxu0 0.0
    %621 = vmatpush1.msra.mxu0 0.0
    %622 = vmatprep.subr.mxu0 0.0
    %623 = vmatpush1.msra.mxu0 0.0
    %624 = vmatprep.subr.mxu0 0.0
    %625 = vmatpush1.msra.mxu0 0.0
    %626 = vmatprep.subr.mxu0 0.0
    %627 = vmatpush1.msra.mxu0 0.0
    %628 = vmatprep.subr.mxu0 0.0
    %629 = vmatpush1.msra.mxu0 0.0
    %630 = vmatprep.subr.mxu0 0.0
    %631 = vmatpush1.msra.mxu0 0.0
    %632 = vmatprep.mubr.f32.mxu0 0.0
    %633 = vmatmul.mubr.f32.gmra.mrb[0].mxu0 %v567
    %v634 = vpop.f32.mrb[0].mxu0
    %v635 = vadd.f32 0.0, %v634
    %v636 = vpop.f32.mrb[0].mxu0
    %v637 = vadd.f32 0.0, %v636
    %638 = vdwg.mxu0
    %639 = vmatprep.subr.mxu0 0.0
    %640 = vmatpush1.msra.mxu0 %v498
    %641 = vmatprep.subr.mxu0 0.0
    %642 = vmatpush1.msra.mxu0 %v501
    %643 = vmatprep.subr.mxu0 0.0
    %644 = vmatpush1.msra.mxu0 %v504
    %645 = vmatprep.subr.mxu0 0.0
    %646 = vmatpush1.msra.mxu0 %v507
    %647 = vmatprep.subr.mxu0 0.0
    %648 = vmatpush1.msra.mxu0 %v510
    %649 = vmatprep.subr.mxu0 0.0
    %650 = vmatpush1.msra.mxu0 %v513
    %651 = vmatprep.subr.mxu0 0.0
    %652 = vmatpush1.msra.mxu0 %v516
    %653 = vmatprep.subr.mxu0 0.0
    %654 = vmatpush1.msra.mxu0 %v519
    %655 = vmatprep.subr.mxu0 0.0
    %656 = vmatpush1.msra.mxu0 %v522
    %657 = vmatprep.subr.mxu0 0.0
    %658 = vmatpush1.msra.mxu0 %v525
    %659 = vmatprep.subr.mxu0 0.0
    %660 = vmatpush1.msra.mxu0 %v528
    %661 = vmatprep.subr.mxu0 0.0
    %662 = vmatpush1.msra.mxu0 %v531
    %663 = vmatprep.subr.mxu0 0.0
    %664 = vmatpush1.msra.mxu0 %v534
    %665 = vmatprep.subr.mxu0 0.0
    %666 = vmatpush1.msra.mxu0 %v537
    %667 = vmatprep.subr.mxu0 0.0
    %668 = vmatpush1.msra.mxu0 %v540
    %669 = vmatprep.subr.mxu0 0.0
    %670 = vmatpush1.msra.mxu0 %v543
    %671 = vmatprep.subr.mxu0 0.0
    %672 = vmatpush1.msra.mxu0 0.0
    %673 = vmatprep.subr.mxu0 0.0
    %674 = vmatpush1.msra.mxu0 0.0
    %675 = vmatprep.subr.mxu0 0.0
    %676 = vmatpush1.msra.mxu0 0.0
    %677 = vmatprep.subr.mxu0 0.0
    %678 = vmatpush1.msra.mxu0 0.0
    %679 = vmatprep.subr.mxu0 0.0
    %680 = vmatpush1.msra.mxu0 0.0
    %681 = vmatprep.subr.mxu0 0.0
    %682 = vmatpush1.msra.mxu0 0.0
    %683 = vmatprep.subr.mxu0 0.0
    %684 = vmatpush1.msra.mxu0 0.0
    %685 = vmatprep.subr.mxu0 0.0
    %686 = vmatpush1.msra.mxu0 0.0
    %687 = vmatprep.subr.mxu0 0.0
    %688 = vmatpush1.msra.mxu0 0.0
    %689 = vmatprep.subr.mxu0 0.0
    %690 = vmatpush1.msra.mxu0 0.0
    %691 = vmatprep.subr.mxu0 0.0
    %692 = vmatpush1.msra.mxu0 0.0
    %693 = vmatprep.subr.mxu0 0.0
    %694 = vmatpush1.msra.mxu0 0.0
    %695 = vmatprep.subr.mxu0 0.0
    %696 = vmatpush1.msra.mxu0 0.0
    %697 = vmatprep.subr.mxu0 0.0
    %698 = vmatpush1.msra.mxu0 0.0
    %699 = vmatprep.subr.mxu0 0.0
    %700 = vmatpush1.msra.mxu0 0.0
    %701 = vmatprep.subr.mxu0 0.0
    %702 = vmatpush1.msra.mxu0 0.0
    %703 = vmatprep.mubr.f32.mxu0 0.0
    %704 = vmatmul.mubr.f32.gmra.mrb[0].mxu0 %v567
    %v705 = vpop.f32.mrb[0].mxu0
    %v706 = vadd.f32 0.0, %v705
    %v707 = vpop.f32.mrb[0].mxu0
    %708 = vdwg.mxu0
    %v709 = vadd.f32 %v351, %v635
    %v710 = vadd.f32 %v353, %v637
    %v711 = vsub.f32 0.0, %v709
    %v712 = vsub.f32 0.0, %v710
    %v713 = vmul.f32 %v711, 1.442695
    %v714 = vpow.pop %v713
    %v715 = vmul.f32 %v712, 1.442695
    %v716 = vpow.pop %v715
    %v717 = vadd.f32 %v714, 1.0
    %v718 = vadd.f32 %v716, 1.0
    %v719 = vrcp.pop %v717
    %v720 = vmul.f32 1.0, %v719
    %v721 = vrcp.pop %v718
    %v722 = vmul.f32 1.0, %v721
    %v723 = vadd.f32 %v706, %v561
    %v724 = vmul.f32 %v720, %v723
    %v725 = vadd.f32 %v463, %v724
    %v726 = vtanh.pop %v725
    %v727 = vsub.f32 1.0, %v722
    %v728 = vmul.f32 %v727, %v726
    %v729 = vmul.f32 %v722, %v567
    %v730 = vadd.f32 %v728, %v729
    %731 = vmatprep.subr.mxu0 %v497
    %732 = vmatpush1.msra.mxu0 %v496
    %733 = vmatprep.subr.mxu0 %v500
    %734 = vmatpush1.msra.mxu0 %v499
    %735 = vmatprep.subr.mxu0 %v503
    %736 = vmatpush1.msra.mxu0 %v502
    %737 = vmatprep.subr.mxu0 %v506
    %738 = vmatpush1.msra.mxu0 %v505
    %739 = vmatprep.subr.mxu0 %v509
    %740 = vmatpush1.msra.mxu0 %v508
    %741 = vmatprep.subr.mxu0 %v512
    %742 = vmatpush1.msra.mxu0 %v511
    %743 = vmatprep.subr.mxu0 %v515
    %744 = vmatpush1.msra.mxu0 %v514
    %745 = vmatprep.subr.mxu0 %v518
    %746 = vmatpush1.msra.mxu0 %v517
    %747 = vmatprep.subr.mxu0 %v521
    %748 = vmatpush1.msra.mxu0 %v520
    %749 = vmatprep.subr.mxu0 %v524
    %750 = vmatpush1.msra.mxu0 %v523
    %751 = vmatprep.subr.mxu0 %v527
    %752 = vmatpush1.msra.mxu0 %v526
    %753 = vmatprep.subr.mxu0 %v530
    %754 = vmatpush1.msra.mxu0 %v529
    %755 = vmatprep.subr.mxu0 %v533
    %756 = vmatpush1.msra.mxu0 %v532
    %757 = vmatprep.subr.mxu0 %v536
    %758 = vmatpush1.msra.mxu0 %v535
    %759 = vmatprep.subr.mxu0 %v539
    %760 = vmatpush1.msra.mxu0 %v538
    %761 = vmatprep.subr.mxu0 %v542
    %762 = vmatpush1.msra.mxu0 %v541
    %763 = vmatprep.subr.mxu0 0.0
    %764 = vmatpush1.msra.mxu0 0.0
    %765 = vmatprep.subr.mxu0 0.0
    %766 = vmatpush1.msra.mxu0 0.0
    %767 = vmatprep.subr.mxu0 0.0
    %768 = vmatpush1.msra.mxu0 0.0
    %769 = vmatprep.subr.mxu0 0.0
    %770 = vmatpush1.msra.mxu0 0.0
    %771 = vmatprep.subr.mxu0 0.0
    %772 = vmatpush1.msra.mxu0 0.0
    %773 = vmatprep.subr.mxu0 0.0
    %774 = vmatpush1.msra.mxu0 0.0
    %775 = vmatprep.subr.mxu0 0.0
    %776 = vmatpush1.msra.mxu0 0.0
    %777 = vmatprep.subr.mxu0 0.0
    %778 = vmatpush1.msra.mxu0 0.0
    %779 = vmatprep.subr.mxu0 0.0
    %780 = vmatpush1.msra.mxu0 0.0
    %781 = vmatprep.subr.mxu0 0.0
    %782 = vmatpush1.msra.mxu0 0.0
    %783 = vmatprep.subr.mxu0 0.0
    %784 = vmatpush1.msra.mxu0 0.0
    %785 = vmatprep.subr.mxu0 0.0
    %786 = vmatpush1.msra.mxu0 0.0
    %787 = vmatprep.subr.mxu0 0.0
    %788 = vmatpush1.msra.mxu0 0.0
    %789 = vmatprep.subr.mxu0 0.0
    %790 = vmatpush1.msra.mxu0 0.0
    %791 = vmatprep.subr.mxu0 0.0
    %792 = vmatpush1.msra.mxu0 0.0
    %793 = vmatprep.subr.mxu0 0.0
    %794 = vmatpush1.msra.mxu0 0.0
    %795 = vmatprep.mubr.f32.mxu0 0.0
    %796 = vmatmul.mubr.f32.gmra.mrb[0].mxu0 %v730
    %v797 = vpop.f32.mrb[0].mxu0
    %v798 = vadd.f32 0.0, %v797
    %v799 = vpop.f32.mrb[0].mxu0
    %v800 = vadd.f32 0.0, %v799
    %801 = vdwg.mxu0
    %802 = vmatprep.subr.mxu0 0.0
    %803 = vmatpush1.msra.mxu0 %v498
    %804 = vmatprep.subr.mxu0 0.0
    %805 = vmatpush1.msra.mxu0 %v501
    %806 = vmatprep.subr.mxu0 0.0
    %807 = vmatpush1.msra.mxu0 %v504
    %808 = vmatprep.subr.mxu0 0.0
    %809 = vmatpush1.msra.mxu0 %v507
    %810 = vmatprep.subr.mxu0 0.0
    %811 = vmatpush1.msra.mxu0 %v510
    %812 = vmatprep.subr.mxu0 0.0
    %813 = vmatpush1.msra.mxu0 %v513
    %814 = vmatprep.subr.mxu0 0.0
    %815 = vmatpush1.msra.mxu0 %v516
    %816 = vmatprep.subr.mxu0 0.0
    %817 = vmatpush1.msra.mxu0 %v519
    %818 = vmatprep.subr.mxu0 0.0
    %819 = vmatpush1.msra.mxu0 %v522
    %820 = vmatprep.subr.mxu0 0.0
    %821 = vmatpush1.msra.mxu0 %v525
    %822 = vmatprep.subr.mxu0 0.0
    %823 = vmatpush1.msra.mxu0 %v528
    %824 = vmatprep.subr.mxu0 0.0
    %825 = vmatpush1.msra.mxu0 %v531
    %826 = vmatprep.subr.mxu0 0.0
    %827 = vmatpush1.msra.mxu0 %v534
    %828 = vmatprep.subr.mxu0 0.0
    %829 = vmatpush1.msra.mxu0 %v537
    %830 = vmatprep.subr.mxu0 0.0
    %831 = vmatpush1.msra.mxu0 %v540
    %832 = vmatprep.subr.mxu0 0.0
    %833 = vmatpush1.msra.mxu0 %v543
    %834 = vmatprep.subr.mxu0 0.0
    %835 = vmatpush1.msra.mxu0 0.0
    %836 = vmatprep.subr.mxu0 0.0
    %837 = vmatpush1.msra.mxu0 0.0
    %838 = vmatprep.subr.mxu0 0.0
    %839 = vmatpush1.msra.mxu0 0.0
    %840 = vmatprep.subr.mxu0 0.0
    %841 = vmatpush1.msra.mxu0 0.0
    %842 = vmatprep.subr.mxu0 0.0
    %843 = vmatpush1.msra.mxu0 0.0
    %844 = vmatprep.subr.mxu0 0.0
    %845 = vmatpush1.msra.mxu0 0.0
    %846 = vmatprep.subr.mxu0 0.0
    %847 = vmatpush1.msra.mxu0 0.0
    %848 = vmatprep.subr.mxu0 0.0
    %849 = vmatpush1.msra.mxu0 0.0
    %850 = vmatprep.subr.mxu0 0.0
    %851 = vmatpush1.msra.mxu0 0.0
    %852 = vmatprep.subr.mxu0 0.0
    %853 = vmatpush1.msra.mxu0 0.0
    %854 = vmatprep.subr.mxu0 0.0
    %855 = vmatpush1.msra.mxu0 0.0
    %856 = vmatprep.subr.mxu0 0.0
    %857 = vmatpush1.msra.mxu0 0.0
    %858 = vmatprep.subr.mxu0 0.0
    %859 = vmatpush1.msra.mxu0 0.0
    %860 = vmatprep.subr.mxu0 0.0
    %861 = vmatpush1.msra.mxu0 0.0
    %862 = vmatprep.subr.mxu0 0.0
    %863 = vmatpush1.msra.mxu0 0.0
    %864 = vmatprep.subr.mxu0 0.0
    %865 = vmatpush1.msra.mxu0 0.0
    %866 = vmatprep.mubr.f32.mxu0 0.0
    %867 = vmatmul.mubr.f32.gmra.mrb[0].mxu0 %v730
    %v868 = vpop.f32.mrb[0].mxu0
    %v869 = vadd.f32 0.0, %v868
    %v870 = vpop.f32.mrb[0].mxu0
    %871 = vdwg.mxu0
    %v872 = vadd.f32 %v357, %v798
    %v873 = vadd.f32 %v359, %v800
    %v874 = vsub.f32 0.0, %v872
    %v875 = vsub.f32 0.0, %v873
    %v876 = vmul.f32 %v874, 1.442695
    %v877 = vpow.pop %v876
    %v878 = vmul.f32 %v875, 1.442695
    %v879 = vpow.pop %v878
    %v880 = vadd.f32 %v877, 1.0
    %v881 = vadd.f32 %v879, 1.0
    %v882 = vrcp.pop %v880
    %v883 = vmul.f32 1.0, %v882
    %v884 = vrcp.pop %v881
    %v885 = vmul.f32 1.0, %v884
    %v886 = vadd.f32 %v869, %v561
    %v887 = vmul.f32 %v883, %v886
    %v888 = vadd.f32 %v468, %v887
    %v889 = vtanh.pop %v888
    %v890 = vsub.f32 1.0, %v885
    %v891 = vmul.f32 %v890, %v889
    %v892 = vmul.f32 %v885, %v730
    %v893 = vadd.f32 %v891, %v892
    %894 = vmatprep.subr.mxu0 %v497
    %895 = vmatpush1.msra.mxu0 %v496
    %896 = vmatprep.subr.mxu0 %v500
    %897 = vmatpush1.msra.mxu0 %v499
    %898 = vmatprep.subr.mxu0 %v503
    %899 = vmatpush1.msra.mxu0 %v502
    %900 = vmatprep.subr.mxu0 %v506
    %901 = vmatpush1.msra.mxu0 %v505
    %902 = vmatprep.subr.mxu0 %v509
    %903 = vmatpush1.msra.mxu0 %v508
    %904 = vmatprep.subr.mxu0 %v512
    %905 = vmatpush1.msra.mxu0 %v511
    %906 = vmatprep.subr.mxu0 %v515
    %907 = vmatpush1.msra.mxu0 %v514
    %908 = vmatprep.subr.mxu0 %v518
    %909 = vmatpush1.msra.mxu0 %v517
    %910 = vmatprep.subr.mxu0 %v521
    %911 = vmatpush1.msra.mxu0 %v520
    %912 = vmatprep.subr.mxu0 %v524
    %913 = vmatpush1.msra.mxu0 %v523
    %914 = vmatprep.subr.mxu0 %v527
    %915 = vmatpush1.msra.mxu0 %v526
    %916 = vmatprep.subr.mxu0 %v530
    %917 = vmatpush1.msra.mxu0 %v529
    %918 = vmatprep.subr.mxu0 %v533
    %919 = vmatpush1.msra.mxu0 %v532
    %920 = vmatprep.subr.mxu0 %v536
    %921 = vmatpush1.msra.mxu0 %v535
    %922 = vmatprep.subr.mxu0 %v539
    %923 = vmatpush1.msra.mxu0 %v538
    %924 = vmatprep.subr.mxu0 %v542
    %925 = vmatpush1.msra.mxu0 %v541
    %926 = vmatprep.subr.mxu0 0.0
    %927 = vmatpush1.msra.mxu0 0.0
    %928 = vmatprep.subr.mxu0 0.0
    %929 = vmatpush1.msra.mxu0 0.0
    %930 = vmatprep.subr.mxu0 0.0
    %931 = vmatpush1.msra.mxu0 0.0
    %932 = vmatprep.subr.mxu0 0.0
    %933 = vmatpush1.msra.mxu0 0.0
    %934 = vmatprep.subr.mxu0 0.0
    %935 = vmatpush1.msra.mxu0 0.0
    %936 = vmatprep.subr.mxu0 0.0
    %937 = vmatpush1.msra.mxu0 0.0
    %938 = vmatprep.subr.mxu0 0.0
    %939 = vmatpush1.msra.mxu0 0.0
    %940 = vmatprep.subr.mxu0 0.0
    %941 = vmatpush1.msra.mxu0 0.0
    %942 = vmatprep.subr.mxu0 0.0
    %943 = vmatpush1.msra.mxu0 0.0
    %944 = vmatprep.subr.mxu0 0.0
    %945 = vmatpush1.msra.mxu0 0.0
    %946 = vmatprep.subr.mxu0 0.0
    %947 = vmatpush1.msra.mxu0 0.0
    %948 = vmatprep.subr.mxu0 0.0
    %949 = vmatpush1.msra.mxu0 0.0
    %950 = vmatprep.subr.mxu0 0.0
    %951 = vmatpush1.msra.mxu0 0.0
    %952 = vmatprep.subr.mxu0 0.0
    %953 = vmatpush1.msra.mxu0 0.0
    %954 = vmatprep.subr.mxu0 0.0
    %955 = vmatpush1.msra.mxu0 0.0
    %956 = vmatprep.subr.mxu0 0.0
    %957 = vmatpush1.msra.mxu0 0.0
    %958 = vmatprep.mubr.f32.mxu0 0.0
    %959 = vmatmul.mubr.f32.gmra.mrb[0].mxu0 %v893
    %v960 = vpop.f32.mrb[0].mxu0
    %v961 = vadd.f32 0.0, %v960
    %v962 = vpop.f32.mrb[0].mxu0
    %v963 = vadd.f32 0.0, %v962
    %964 = vdwg.mxu0
    %965 = vmatprep.subr.mxu0 0.0
    %966 = vmatpush1.msra.mxu0 %v498
    %967 = vmatprep.subr.mxu0 0.0
    %968 = vmatpush1.msra.mxu0 %v501
    %969 = vmatprep.subr.mxu0 0.0
    %970 = vmatpush1.msra.mxu0 %v504
    %971 = vmatprep.subr.mxu0 0.0
    %972 = vmatpush1.msra.mxu0 %v507
    %973 = vmatprep.subr.mxu0 0.0
    %974 = vmatpush1.msra.mxu0 %v510
    %975 = vmatprep.subr.mxu0 0.0
    %976 = vmatpush1.msra.mxu0 %v513
    %977 = vmatprep.subr.mxu0 0.0
    %978 = vmatpush1.msra.mxu0 %v516
    %979 = vmatprep.subr.mxu0 0.0
    %980 = vmatpush1.msra.mxu0 %v519
    %981 = vmatprep.subr.mxu0 0.0
    %982 = vmatpush1.msra.mxu0 %v522
    %983 = vmatprep.subr.mxu0 0.0
    %984 = vmatpush1.msra.mxu0 %v525
    %985 = vmatprep.subr.mxu0 0.0
    %986 = vmatpush1.msra.mxu0 %v528
    %987 = vmatprep.subr.mxu0 0.0
    %988 = vmatpush1.msra.mxu0 %v531
    %989 = vmatprep.subr.mxu0 0.0
    %990 = vmatpush1.msra.mxu0 %v534
    %991 = vmatprep.subr.mxu0 0.0
    %992 = vmatpush1.msra.mxu0 %v537
    %993 = vmatprep.subr.mxu0 0.0
    %994 = vmatpush1.msra.mxu0 %v540
    %995 = vmatprep.subr.mxu0 0.0
    %996 = vmatpush1.msra.mxu0 %v543
    %997 = vmatprep.subr.mxu0 0.0
    %998 = vmatpush1.msra.mxu0 0.0
    %999 = vmatprep.subr.mxu0 0.0
    %1000 = vmatpush1.msra.mxu0 0.0
    %1001 = vmatprep.subr.mxu0 0.0
    %1002 = vmatpush1.msra.mxu0 0.0
    %1003 = vmatprep.subr.mxu0 0.0
    %1004 = vmatpush1.msra.mxu0 0.0
    %1005 = vmatprep.subr.mxu0 0.0
    %1006 = vmatpush1.msra.mxu0 0.0
    %1007 = vmatprep.subr.mxu0 0.0
    %1008 = vmatpush1.msra.mxu0 0.0
    %1009 = vmatprep.subr.mxu0 0.0
    %1010 = vmatpush1.msra.mxu0 0.0
    %1011 = vmatprep.subr.mxu0 0.0
    %1012 = vmatpush1.msra.mxu0 0.0
    %1013 = vmatprep.subr.mxu0 0.0
    %1014 = vmatpush1.msra.mxu0 0.0
    %1015 = vmatprep.subr.mxu0 0.0
    %1016 = vmatpush1.msra.mxu0 0.0
    %1017 = vmatprep.subr.mxu0 0.0
    %1018 = vmatpush1.msra.mxu0 0.0
    %1019 = vmatprep.subr.mxu0 0.0
    %1020 = vmatpush1.msra.mxu0 0.0
    %1021 = vmatprep.subr.mxu0 0.0
    %1022 = vmatpush1.msra.mxu0 0.0
    %1023 = vmatprep.subr.mxu0 0.0
    %1024 = vmatpush1.msra.mxu0 0.0
    %1025 = vmatprep.subr.mxu0 0.0
    %1026 = vmatpush1.msra.mxu0 0.0
    %1027 = vmatprep.subr.mxu0 0.0
    %1028 = vmatpush1.msra.mxu0 0.0
    %1029 = vmatprep.mubr.f32.mxu0 0.0
    %1030 = vmatmul.mubr.f32.gmra.mrb[0].mxu0 %v893
    %v1031 = vpop.f32.mrb[0].mxu0
    %v1032 = vadd.f32 0.0, %v1031
    %v1033 = vpop.f32.mrb[0].mxu0
    %1034 = vdwg.mxu0
    %v1035 = vadd.f32 %v363, %v961
    %v1036 = vadd.f32 %v365, %v963
    %v1037 = vsub.f32 0.0, %v1035
    %v1038 = vsub.f32 0.0, %v1036
    %v1039 = vmul.f32 %v1037, 1.442695
    %v1040 = vpow.pop %v1039
    %v1041 = vmul.f32 %v1038, 1.442695
    %v1042 = vpow.pop %v1041
    %v1043 = vadd.f32 %v1040, 1.0
    %v1044 = vadd.f32 %v1042, 1.0
    %v1045 = vrcp.pop %v1043
    %v1046 = vmul.f32 1.0, %v1045
    %v1047 = vrcp.pop %v1044
    %v1048 = vmul.f32 1.0, %v1047
    %v1049 = vadd.f32 %v1032, %v561
    %v1050 = vmul.f32 %v1046, %v1049
    %v1051 = vadd.f32 %v473, %v1050
    %v1052 = vtanh.pop %v1051
    %v1053 = vsub.f32 1.0, %v1048
    %v1054 = vmul.f32 %v1053, %v1052
    %v1055 = vmul.f32 %v1048, %v893
    %v1056 = vadd.f32 %v1054, %v1055
    %1057 = vmatprep.subr.mxu0 %v497
    %1058 = vmatpush1.msra.mxu0 %v496
    %1059 = vmatprep.subr.mxu0 %v500
    %1060 = vmatpush1.msra.mxu0 %v499
    %1061 = vmatprep.subr.mxu0 %v503
    %1062 = vmatpush1.msra.mxu0 %v502
    %1063 = vmatprep.subr.mxu0 %v506
    %1064 = vmatpush1.msra.mxu0 %v505
    %1065 = vmatprep.subr.mxu0 %v509
    %1066 = vmatpush1.msra.mxu0 %v508
    %1067 = vmatprep.subr.mxu0 %v512
    %1068 = vmatpush1.msra.mxu0 %v511
    %1069 = vmatprep.subr.mxu0 %v515
    %1070 = vmatpush1.msra.mxu0 %v514
    %1071 = vmatprep.subr.mxu0 %v518
    %1072 = vmatpush1.msra.mxu0 %v517
    %1073 = vmatprep.subr.mxu0 %v521
    %1074 = vmatpush1.msra.mxu0 %v520
    %1075 = vmatprep.subr.mxu0 %v524
    %1076 = vmatpush1.msra.mxu0 %v523
    %1077 = vmatprep.subr.mxu0 %v527
    %1078 = vmatpush1.msra.mxu0 %v526
    %1079 = vmatprep.subr.mxu0 %v530
    %1080 = vmatpush1.msra.mxu0 %v529
    %1081 = vmatprep.subr.mxu0 %v533
    %1082 = vmatpush1.msra.mxu0 %v532
    %1083 = vmatprep.subr.mxu0 %v536
    %1084 = vmatpush1.msra.mxu0 %v535
    %1085 = vmatprep.subr.mxu0 %v539
    %1086 = vmatpush1.msra.mxu0 %v538
    %1087 = vmatprep.subr.mxu0 %v542
    %1088 = vmatpush1.msra.mxu0 %v541
    %1089 = vmatprep.subr.mxu0 0.0
    %1090 = vmatpush1.msra.mxu0 0.0
    %1091 = vmatprep.subr.mxu0 0.0
    %1092 = vmatpush1.msra.mxu0 0.0
    %1093 = vmatprep.subr.mxu0 0.0
    %1094 = vmatpush1.msra.mxu0 0.0
    %1095 = vmatprep.subr.mxu0 0.0
    %1096 = vmatpush1.msra.mxu0 0.0
    %1097 = vmatprep.subr.mxu0 0.0
    %1098 = vmatpush1.msra.mxu0 0.0
    %1099 = vmatprep.subr.mxu0 0.0
    %1100 = vmatpush1.msra.mxu0 0.0
    %1101 = vmatprep.subr.mxu0 0.0
    %1102 = vmatpush1.msra.mxu0 0.0
    %1103 = vmatprep.subr.mxu0 0.0
    %1104 = vmatpush1.msra.mxu0 0.0
    %1105 = vmatprep.subr.mxu0 0.0
    %1106 = vmatpush1.msra.mxu0 0.0
    %1107 = vmatprep.subr.mxu0 0.0
    %1108 = vmatpush1.msra.mxu0 0.0
    %1109 = vmatprep.subr.mxu0 0.0
    %1110 = vmatpush1.msra.mxu0 0.0
    %1111 = vmatprep.subr.mxu0 0.0
    %1112 = vmatpush1.msra.mxu0 0.0
    %1113 = vmatprep.subr.mxu0 0.0
    %1114 = vmatpush1.msra.mxu0 0.0
    %1115 = vmatprep.subr.mxu0 0.0
    %1116 = vmatpush1.msra.mxu0 0.0
    %1117 = vmatprep.subr.mxu0 0.0
    %1118 = vmatpush1.msra.mxu0 0.0
    %1119 = vmatprep.subr.mxu0 0.0
    %1120 = vmatpush1.msra.mxu0 0.0
    %1121 = vmatprep.mubr.f32.mxu0 0.0
    %1122 = vmatmul.mubr.f32.gmra.mrb[0].mxu0 %v1056
    %v1123 = vpop.f32.mrb[0].mxu0
    %v1124 = vadd.f32 0.0, %v1123
    %v1125 = vpop.f32.mrb[0].mxu0
    %v1126 = vadd.f32 0.0, %v1125
    %1127 = vdwg.mxu0
    %1128 = vmatprep.subr.mxu0 0.0
    %1129 = vmatpush1.msra.mxu0 %v498
    %1130 = vmatprep.subr.mxu0 0.0
    %1131 = vmatpush1.msra.mxu0 %v501
    %1132 = vmatprep.subr.mxu0 0.0
    %1133 = vmatpush1.msra.mxu0 %v504
    %1134 = vmatprep.subr.mxu0 0.0
    %1135 = vmatpush1.msra.mxu0 %v507
    %1136 = vmatprep.subr.mxu0 0.0
    %1137 = vmatpush1.msra.mxu0 %v510
    %1138 = vmatprep.subr.mxu0 0.0
    %1139 = vmatpush1.msra.mxu0 %v513
    %1140 = vmatprep.subr.mxu0 0.0
    %1141 = vmatpush1.msra.mxu0 %v516
    %1142 = vmatprep.subr.mxu0 0.0
    %1143 = vmatpush1.msra.mxu0 %v519
    %1144 = vmatprep.subr.mxu0 0.0
    %1145 = vmatpush1.msra.mxu0 %v522
    %1146 = vmatprep.subr.mxu0 0.0
    %1147 = vmatpush1.msra.mxu0 %v525
    %1148 = vmatprep.subr.mxu0 0.0
    %1149 = vmatpush1.msra.mxu0 %v528
    %1150 = vmatprep.subr.mxu0 0.0
    %1151 = vmatpush1.msra.mxu0 %v531
    %1152 = vmatprep.subr.mxu0 0.0
    %1153 = vmatpush1.msra.mxu0 %v534
    %1154 = vmatprep.subr.mxu0 0.0
    %1155 = vmatpush1.msra.mxu0 %v537
    %1156 = vmatprep.subr.mxu0 0.0
    %1157 = vmatpush1.msra.mxu0 %v540
    %1158 = vmatprep.subr.mxu0 0.0
    %1159 = vmatpush1.msra.mxu0 %v543
    %1160 = vmatprep.subr.mxu0 0.0
    %1161 = vmatpush1.msra.mxu0 0.0
    %1162 = vmatprep.subr.mxu0 0.0
    %1163 = vmatpush1.msra.mxu0 0.0
    %1164 = vmatprep.subr.mxu0 0.0
    %1165 = vmatpush1.msra.mxu0 0.0
    %1166 = vmatprep.subr.mxu0 0.0
    %1167 = vmatpush1.msra.mxu0 0.0
    %1168 = vmatprep.subr.mxu0 0.0
    %1169 = vmatpush1.msra.mxu0 0.0
    %1170 = vmatprep.subr.mxu0 0.0
    %1171 = vmatpush1.msra.mxu0 0.0
    %1172 = vmatprep.subr.mxu0 0.0
    %1173 = vmatpush1.msra.mxu0 0.0
    %1174 = vmatprep.subr.mxu0 0.0
    %1175 = vmatpush1.msra.mxu0 0.0
    %1176 = vmatprep.subr.mxu0 0.0
    %1177 = vmatpush1.msra.mxu0 0.0
    %1178 = vmatprep.subr.mxu0 0.0
    %1179 = vmatpush1.msra.mxu0 0.0
    %1180 = vmatprep.subr.mxu0 0.0
    %1181 = vmatpush1.msra.mxu0 0.0
    %1182 = vmatprep.subr.mxu0 0.0
    %1183 = vmatpush1.msra.mxu0 0.0
    %1184 = vmatprep.subr.mxu0 0.0
    %1185 = vmatpush1.msra.mxu0 0.0
    %1186 = vmatprep.subr.mxu0 0.0
    %1187 = vmatpush1.msra.mxu0 0.0
    %1188 = vmatprep.subr.mxu0 0.0
    %1189 = vmatpush1.msra.mxu0 0.0
    %1190 = vmatprep.subr.mxu0 0.0
    %1191 = vmatpush1.msra.mxu0 0.0
    %1192 = vmatprep.mubr.f32.mxu0 0.0
    %1193 = vmatmul.mubr.f32.gmra.mrb[0].mxu0 %v1056
    %v1194 = vpop.f32.mrb[0].mxu0
    %v1195 = vadd.f32 0.0, %v1194
    %v1196 = vpop.f32.mrb[0].mxu0
    %1197 = vdwg.mxu0
    %v1198 = vadd.f32 %v369, %v1124
    %v1199 = vadd.f32 %v371, %v1126
    %v1200 = vsub.f32 0.0, %v1198
    %v1201 = vsub.f32 0.0, %v1199
    %v1202 = vmul.f32 %v1200, 1.442695
    %v1203 = vpow.pop %v1202
    %v1204 = vmul.f32 %v1201, 1.442695
    %v1205 = vpow.pop %v1204
    %v1206 = vadd.f32 %v1203, 1.0
    %v1207 = vadd.f32 %v1205, 1.0
    %v1208 = vrcp.pop %v1206
    %v1209 = vmul.f32 1.0, %v1208
    %v1210 = vrcp.pop %v1207
    %v1211 = vmul.f32 1.0, %v1210
    %v1212 = vadd.f32 %v1195, %v561
    %v1213 = vmul.f32 %v1209, %v1212
    %v1214 = vadd.f32 %v478, %v1213
    %v1215 = vtanh.pop %v1214
    %v1216 = vsub.f32 1.0, %v1211
    %v1217 = vmul.f32 %v1216, %v1215
    %v1218 = vmul.f32 %v1211, %v1056
    %v1219 = vadd.f32 %v1217, %v1218
    %1220 = vmatprep.subr.mxu0 %v497
    %1221 = vmatpush1.msra.mxu0 %v496
    %1222 = vmatprep.subr.mxu0 %v500
    %1223 = vmatpush1.msra.mxu0 %v499
    %1224 = vmatprep.subr.mxu0 %v503
    %1225 = vmatpush1.msra.mxu0 %v502
    %1226 = vmatprep.subr.mxu0 %v506
    %1227 = vmatpush1.msra.mxu0 %v505
    %1228 = vmatprep.subr.mxu0 %v509
    %1229 = vmatpush1.msra.mxu0 %v508
    %1230 = vmatprep.subr.mxu0 %v512
    %1231 = vmatpush1.msra.mxu0 %v511
    %1232 = vmatprep.subr.mxu0 %v515
    %1233 = vmatpush1.msra.mxu0 %v514
    %1234 = vmatprep.subr.mxu0 %v518
    %1235 = vmatpush1.msra.mxu0 %v517
    %1236 = vmatprep.subr.mxu0 %v521
    %1237 = vmatpush1.msra.mxu0 %v520
    %1238 = vmatprep.subr.mxu0 %v524
    %1239 = vmatpush1.msra.mxu0 %v523
    %1240 = vmatprep.subr.mxu0 %v527
    %1241 = vmatpush1.msra.mxu0 %v526
    %1242 = vmatprep.subr.mxu0 %v530
    %1243 = vmatpush1.msra.mxu0 %v529
    %1244 = vmatprep.subr.mxu0 %v533
    %1245 = vmatpush1.msra.mxu0 %v532
    %1246 = vmatprep.subr.mxu0 %v536
    %1247 = vmatpush1.msra.mxu0 %v535
    %1248 = vmatprep.subr.mxu0 %v539
    %1249 = vmatpush1.msra.mxu0 %v538
    %1250 = vmatprep.subr.mxu0 %v542
    %1251 = vmatpush1.msra.mxu0 %v541
    %1252 = vmatprep.subr.mxu0 0.0
    %1253 = vmatpush1.msra.mxu0 0.0
    %1254 = vmatprep.subr.mxu0 0.0
    %1255 = vmatpush1.msra.mxu0 0.0
    %1256 = vmatprep.subr.mxu0 0.0
    %1257 = vmatpush1.msra.mxu0 0.0
    %1258 = vmatprep.subr.mxu0 0.0
    %1259 = vmatpush1.msra.mxu0 0.0
    %1260 = vmatprep.subr.mxu0 0.0
    %1261 = vmatpush1.msra.mxu0 0.0
    %1262 = vmatprep.subr.mxu0 0.0
    %1263 = vmatpush1.msra.mxu0 0.0
    %1264 = vmatprep.subr.mxu0 0.0
    %1265 = vmatpush1.msra.mxu0 0.0
    %1266 = vmatprep.subr.mxu0 0.0
    %1267 = vmatpush1.msra.mxu0 0.0
    %1268 = vmatprep.subr.mxu0 0.0
    %1269 = vmatpush1.msra.mxu0 0.0
    %1270 = vmatprep.subr.mxu0 0.0
    %1271 = vmatpush1.msra.mxu0 0.0
    %1272 = vmatprep.subr.mxu0 0.0
    %1273 = vmatpush1.msra.mxu0 0.0
    %1274 = vmatprep.subr.mxu0 0.0
    %1275 = vmatpush1.msra.mxu0 0.0
    %1276 = vmatprep.subr.mxu0 0.0
    %1277 = vmatpush1.msra.mxu0 0.0
    %1278 = vmatprep.subr.mxu0 0.0
    %1279 = vmatpush1.msra.mxu0 0.0
    %1280 = vmatprep.subr.mxu0 0.0
    %1281 = vmatpush1.msra.mxu0 0.0
    %1282 = vmatprep.subr.mxu0 0.0
    %1283 = vmatpush1.msra.mxu0 0.0
    %1284 = vmatprep.mubr.f32.mxu0 0.0
    %1285 = vmatmul.mubr.f32.gmra.mrb[0].mxu0 %v1219
    %v1286 = vpop.f32.mrb[0].mxu0
    %v1287 = vadd.f32 0.0, %v1286
    %v1288 = vpop.f32.mrb[0].mxu0
    %v1289 = vadd.f32 0.0, %v1288
    %1290 = vdwg.mxu0
    %1291 = vmatprep.subr.mxu0 0.0
    %1292 = vmatpush1.msra.mxu0 %v498
    %1293 = vmatprep.subr.mxu0 0.0
    %1294 = vmatpush1.msra.mxu0 %v501
    %1295 = vmatprep.subr.mxu0 0.0
    %1296 = vmatpush1.msra.mxu0 %v504
    %1297 = vmatprep.subr.mxu0 0.0
    %1298 = vmatpush1.msra.mxu0 %v507
    %1299 = vmatprep.subr.mxu0 0.0
    %1300 = vmatpush1.msra.mxu0 %v510
    %1301 = vmatprep.subr.mxu0 0.0
    %1302 = vmatpush1.msra.mxu0 %v513
    %1303 = vmatprep.subr.mxu0 0.0
    %1304 = vmatpush1.msra.mxu0 %v516
    %1305 = vmatprep.subr.mxu0 0.0
    %1306 = vmatpush1.msra.mxu0 %v519
    %1307 = vmatprep.subr.mxu0 0.0
    %1308 = vmatpush1.msra.mxu0 %v522
    %1309 = vmatprep.subr.mxu0 0.0
    %1310 = vmatpush1.msra.mxu0 %v525
    %1311 = vmatprep.subr.mxu0 0.0
    %1312 = vmatpush1.msra.mxu0 %v528
    %1313 = vmatprep.subr.mxu0 0.0
    %1314 = vmatpush1.msra.mxu0 %v531
    %1315 = vmatprep.subr.mxu0 0.0
    %1316 = vmatpush1.msra.mxu0 %v534
    %1317 = vmatprep.subr.mxu0 0.0
    %1318 = vmatpush1.msra.mxu0 %v537
    %1319 = vmatprep.subr.mxu0 0.0
    %1320 = vmatpush1.msra.mxu0 %v540
    %1321 = vmatprep.subr.mxu0 0.0
    %1322 = vmatpush1.msra.mxu0 %v543
    %1323 = vmatprep.subr.mxu0 0.0
    %1324 = vmatpush1.msra.mxu0 0.0
    %1325 = vmatprep.subr.mxu0 0.0
    %1326 = vmatpush1.msra.mxu0 0.0
    %1327 = vmatprep.subr.mxu0 0.0
    %1328 = vmatpush1.msra.mxu0 0.0
    %1329 = vmatprep.subr.mxu0 0.0
    %1330 = vmatpush1.msra.mxu0 0.0
    %1331 = vmatprep.subr.mxu0 0.0
    %1332 = vmatpush1.msra.mxu0 0.0
    %1333 = vmatprep.subr.mxu0 0.0
    %1334 = vmatpush1.msra.mxu0 0.0
    %1335 = vmatprep.subr.mxu0 0.0
    %1336 = vmatpush1.msra.mxu0 0.0
    %1337 = vmatprep.subr.mxu0 0.0
    %1338 = vmatpush1.msra.mxu0 0.0
    %1339 = vmatprep.subr.mxu0 0.0
    %1340 = vmatpush1.msra.mxu0 0.0
    %1341 = vmatprep.subr.mxu0 0.0
    %1342 = vmatpush1.msra.mxu0 0.0
    %1343 = vmatprep.subr.mxu0 0.0
    %1344 = vmatpush1.msra.mxu0 0.0
    %1345 = vmatprep.subr.mxu0 0.0
    %1346 = vmatpush1.msra.mxu0 0.0
    %1347 = vmatprep.subr.mxu0 0.0
    %1348 = vmatpush1.msra.mxu0 0.0
    %1349 = vmatprep.subr.mxu0 0.0
    %1350 = vmatpush1.msra.mxu0 0.0
    %1351 = vmatprep.subr.mxu0 0.0
    %1352 = vmatpush1.msra.mxu0 0.0
    %1353 = vmatprep.subr.mxu0 0.0
    %1354 = vmatpush1.msra.mxu0 0.0
    %1355 = vmatprep.mubr.f32.mxu0 0.0
    %1356 = vmatmul.mubr.f32.gmra.mrb[0].mxu0 %v1219
    %v1357 = vpop.f32.mrb[0].mxu0
    %v1358 = vadd.f32 0.0, %v1357
    %v1359 = vpop.f32.mrb[0].mxu0
    %1360 = vdwg.mxu0
    %v1361 = vadd.f32 %v375, %v1287
    %v1362 = vadd.f32 %v377, %v1289
    %v1363 = vsub.f32 0.0, %v1361
    %v1364 = vsub.f32 0.0, %v1362
    %v1365 = vmul.f32 %v1363, 1.442695
    %v1366 = vpow.pop %v1365
    %v1367 = vmul.f32 %v1364, 1.442695
    %v1368 = vpow.pop %v1367
    %v1369 = vadd.f32 %v1366, 1.0
    %v1370 = vadd.f32 %v1368, 1.0
    %v1371 = vrcp.pop %v1369
    %v1372 = vmul.f32 1.0, %v1371
    %v1373 = vrcp.pop %v1370
    %v1374 = vmul.f32 1.0, %v1373
    %v1375 = vadd.f32 %v1358, %v561
    %v1376 = vmul.f32 %v1372, %v1375
    %v1377 = vadd.f32 %v483, %v1376
    %v1378 = vtanh.pop %v1377
    %v1379 = vsub.f32 1.0, %v1374
    %v1380 = vmul.f32 %v1379, %v1378
    %v1381 = vmul.f32 %v1374, %v1219
    %v1382 = vadd.f32 %v1380, %v1381
    %1383 = vmatprep.subr.mxu0 %v497
    %1384 = vmatpush1.msra.mxu0 %v496
    %1385 = vmatprep.subr.mxu0 %v500
    %1386 = vmatpush1.msra.mxu0 %v499
    %1387 = vmatprep.subr.mxu0 %v503
    %1388 = vmatpush1.msra.mxu0 %v502
    %1389 = vmatprep.subr.mxu0 %v506
    %1390 = vmatpush1.msra.mxu0 %v505
    %1391 = vmatprep.subr.mxu0 %v509
    %1392 = vmatpush1.msra.mxu0 %v508
    %1393 = vmatprep.subr.mxu0 %v512
    %1394 = vmatpush1.msra.mxu0 %v511
    %1395 = vmatprep.subr.mxu0 %v515
    %1396 = vmatpush1.msra.mxu0 %v514
    %1397 = vmatprep.subr.mxu0 %v518
    %1398 = vmatpush1.msra.mxu0 %v517
    %1399 = vmatprep.subr.mxu0 %v521
    %1400 = vmatpush1.msra.mxu0 %v520
    %1401 = vmatprep.subr.mxu0 %v524
    %1402 = vmatpush1.msra.mxu0 %v523
    %1403 = vmatprep.subr.mxu0 %v527
    %1404 = vmatpush1.msra.mxu0 %v526
    %1405 = vmatprep.subr.mxu0 %v530
    %1406 = vmatpush1.msra.mxu0 %v529
    %1407 = vmatprep.subr.mxu0 %v533
    %1408 = vmatpush1.msra.mxu0 %v532
    %1409 = vmatprep.subr.mxu0 %v536
    %1410 = vmatpush1.msra.mxu0 %v535
    %1411 = vmatprep.subr.mxu0 %v539
    %1412 = vmatpush1.msra.mxu0 %v538
    %1413 = vmatprep.subr.mxu0 %v542
    %1414 = vmatpush1.msra.mxu0 %v541
    %1415 = vmatprep.subr.mxu0 0.0
    %1416 = vmatpush1.msra.mxu0 0.0
    %1417 = vmatprep.subr.mxu0 0.0
    %1418 = vmatpush1.msra.mxu0 0.0
    %1419 = vmatprep.subr.mxu0 0.0
    %1420 = vmatpush1.msra.mxu0 0.0
    %1421 = vmatprep.subr.mxu0 0.0
    %1422 = vmatpush1.msra.mxu0 0.0
    %1423 = vmatprep.subr.mxu0 0.0
    %1424 = vmatpush1.msra.mxu0 0.0
    %1425 = vmatprep.subr.mxu0 0.0
    %1426 = vmatpush1.msra.mxu0 0.0
    %1427 = vmatprep.subr.mxu0 0.0
    %1428 = vmatpush1.msra.mxu0 0.0
    %1429 = vmatprep.subr.mxu0 0.0
    %1430 = vmatpush1.msra.mxu0 0.0
    %1431 = vmatprep.subr.mxu0 0.0
    %1432 = vmatpush1.msra.mxu0 0.0
    %1433 = vmatprep.subr.mxu0 0.0
    %1434 = vmatpush1.msra.mxu0 0.0
    %1435 = vmatprep.subr.mxu0 0.0
    %1436 = vmatpush1.msra.mxu0 0.0
    %1437 = vmatprep.subr.mxu0 0.0
    %1438 = vmatpush1.msra.mxu0 0.0
    %1439 = vmatprep.subr.mxu0 0.0
    %1440 = vmatpush1.msra.mxu0 0.0
    %1441 = vmatprep.subr.mxu0 0.0
    %1442 = vmatpush1.msra.mxu0 0.0
    %1443 = vmatprep.subr.mxu0 0.0
    %1444 = vmatpush1.msra.mxu0 0.0
    %1445 = vmatprep.subr.mxu0 0.0
    %1446 = vmatpush1.msra.mxu0 0.0
    %1447 = vmatprep.mubr.f32.mxu0 0.0
    %1448 = vmatmul.mubr.f32.gmra.mrb[0].mxu0 %v1382
    %v1449 = vpop.f32.mrb[0].mxu0
    %v1450 = vadd.f32 0.0, %v1449
    %v1451 = vpop.f32.mrb[0].mxu0
    %v1452 = vadd.f32 0.0, %v1451
    %1453 = vdwg.mxu0
    %1454 = vmatprep.subr.mxu0 0.0
    %1455 = vmatpush1.msra.mxu0 %v498
    %1456 = vmatprep.subr.mxu0 0.0
    %1457 = vmatpush1.msra.mxu0 %v501
    %1458 = vmatprep.subr.mxu0 0.0
    %1459 = vmatpush1.msra.mxu0 %v504
    %1460 = vmatprep.subr.mxu0 0.0
    %1461 = vmatpush1.msra.mxu0 %v507
    %1462 = vmatprep.subr.mxu0 0.0
    %1463 = vmatpush1.msra.mxu0 %v510
    %1464 = vmatprep.subr.mxu0 0.0
    %1465 = vmatpush1.msra.mxu0 %v513
    %1466 = vmatprep.subr.mxu0 0.0
    %1467 = vmatpush1.msra.mxu0 %v516
    %1468 = vmatprep.subr.mxu0 0.0
    %1469 = vmatpush1.msra.mxu0 %v519
    %1470 = vmatprep.subr.mxu0 0.0
    %1471 = vmatpush1.msra.mxu0 %v522
    %1472 = vmatprep.subr.mxu0 0.0
    %1473 = vmatpush1.msra.mxu0 %v525
    %1474 = vmatprep.subr.mxu0 0.0
    %1475 = vmatpush1.msra.mxu0 %v528
    %1476 = vmatprep.subr.mxu0 0.0
    %1477 = vmatpush1.msra.mxu0 %v531
    %1478 = vmatprep.subr.mxu0 0.0
    %1479 = vmatpush1.msra.mxu0 %v534
    %1480 = vmatprep.subr.mxu0 0.0
    %1481 = vmatpush1.msra.mxu0 %v537
    %1482 = vmatprep.subr.mxu0 0.0
    %1483 = vmatpush1.msra.mxu0 %v540
    %1484 = vmatprep.subr.mxu0 0.0
    %1485 = vmatpush1.msra.mxu0 %v543
    %1486 = vmatprep.subr.mxu0 0.0
    %1487 = vmatpush1.msra.mxu0 0.0
    %1488 = vmatprep.subr.mxu0 0.0
    %1489 = vmatpush1.msra.mxu0 0.0
    %1490 = vmatprep.subr.mxu0 0.0
    %1491 = vmatpush1.msra.mxu0 0.0
    %1492 = vmatprep.subr.mxu0 0.0
    %1493 = vmatpush1.msra.mxu0 0.0
    %1494 = vmatprep.subr.mxu0 0.0
    %1495 = vmatpush1.msra.mxu0 0.0
    %1496 = vmatprep.subr.mxu0 0.0
    %1497 = vmatpush1.msra.mxu0 0.0
    %1498 = vmatprep.subr.mxu0 0.0
    %1499 = vmatpush1.msra.mxu0 0.0
    %1500 = vmatprep.subr.mxu0 0.0
    %1501 = vmatpush1.msra.mxu0 0.0
    %1502 = vmatprep.subr.mxu0 0.0
    %1503 = vmatpush1.msra.mxu0 0.0
    %1504 = vmatprep.subr.mxu0 0.0
    %1505 = vmatpush1.msra.mxu0 0.0
    %1506 = vmatprep.subr.mxu0 0.0
    %1507 = vmatpush1.msra.mxu0 0.0
    %1508 = vmatprep.subr.mxu0 0.0
    %1509 = vmatpush1.msra.mxu0 0.0
    %1510 = vmatprep.subr.mxu0 0.0
    %1511 = vmatpush1.msra.mxu0 0.0
    %1512 = vmatprep.subr.mxu0 0.0
    %1513 = vmatpush1.msra.mxu0 0.0
    %1514 = vmatprep.subr.mxu0 0.0
    %1515 = vmatpush1.msra.mxu0 0.0
    %1516 = vmatprep.subr.mxu0 0.0
    %1517 = vmatpush1.msra.mxu0 0.0
    %1518 = vmatprep.mubr.f32.mxu0 0.0
    %1519 = vmatmul.mubr.f32.gmra.mrb[0].mxu0 %v1382
    %v1520 = vpop.f32.mrb[0].mxu0
    %v1521 = vadd.f32 0.0, %v1520
    %v1522 = vpop.f32.mrb[0].mxu0
    %1523 = vdwg.mxu0
    %v1524 = vadd.f32 %v381, %v1450
    %v1525 = vadd.f32 %v383, %v1452
    %v1526 = vsub.f32 0.0, %v1524
    %v1527 = vsub.f32 0.0, %v1525
    %v1528 = vmul.f32 %v1526, 1.442695
    %v1529 = vpow.pop %v1528
    %v1530 = vmul.f32 %v1527, 1.442695
    %v1531 = vpow.pop %v1530
    %v1532 = vadd.f32 %v1529, 1.0
    %v1533 = vadd.f32 %v1531, 1.0
    %v1534 = vrcp.pop %v1532
    %v1535 = vmul.f32 1.0, %v1534
    %v1536 = vrcp.pop %v1533
    %v1537 = vmul.f32 1.0, %v1536
    %v1538 = vadd.f32 %v1521, %v561
    %v1539 = vmul.f32 %v1535, %v1538
    %v1540 = vadd.f32 %v488, %v1539
    %v1541 = vtanh.pop %v1540
    %v1542 = vsub.f32 1.0, %v1537
    %v1543 = vmul.f32 %v1542, %v1541
    %v1544 = vmul.f32 %v1537, %v1382
    %v1545 = vadd.f32 %v1543, %v1544
    %1546 = vmatprep.subr.mxu0 %v497
    %1547 = vmatpush1.msra.mxu0 %v496
    %1548 = vmatprep.subr.mxu0 %v500
    %1549 = vmatpush1.msra.mxu0 %v499
    %1550 = vmatprep.subr.mxu0 %v503
    %1551 = vmatpush1.msra.mxu0 %v502
    %1552 = vmatprep.subr.mxu0 %v506
    %1553 = vmatpush1.msra.mxu0 %v505
    %1554 = vmatprep.subr.mxu0 %v509
    %1555 = vmatpush1.msra.mxu0 %v508
    %1556 = vmatprep.subr.mxu0 %v512
    %1557 = vmatpush1.msra.mxu0 %v511
    %1558 = vmatprep.subr.mxu0 %v515
    %1559 = vmatpush1.msra.mxu0 %v514
    %1560 = vmatprep.subr.mxu0 %v518
    %1561 = vmatpush1.msra.mxu0 %v517
    %1562 = vmatprep.subr.mxu0 %v521
    %1563 = vmatpush1.msra.mxu0 %v520
    %1564 = vmatprep.subr.mxu0 %v524
    %1565 = vmatpush1.msra.mxu0 %v523
    %1566 = vmatprep.subr.mxu0 %v527
    %1567 = vmatpush1.msra.mxu0 %v526
    %1568 = vmatprep.subr.mxu0 %v530
    %1569 = vmatpush1.msra.mxu0 %v529
    %1570 = vmatprep.subr.mxu0 %v533
    %1571 = vmatpush1.msra.mxu0 %v532
    %1572 = vmatprep.subr.mxu0 %v536
    %1573 = vmatpush1.msra.mxu0 %v535
    %1574 = vmatprep.subr.mxu0 %v539
    %1575 = vmatpush1.msra.mxu0 %v538
    %1576 = vmatprep.subr.mxu0 %v542
    %1577 = vmatpush1.msra.mxu0 %v541
    %1578 = vmatprep.subr.mxu0 0.0
    %1579 = vmatpush1.msra.mxu0 0.0
    %1580 = vmatprep.subr.mxu0 0.0
    %1581 = vmatpush1.msra.mxu0 0.0
    %1582 = vmatprep.subr.mxu0 0.0
    %1583 = vmatpush1.msra.mxu0 0.0
    %1584 = vmatprep.subr.mxu0 0.0
    %1585 = vmatpush1.msra.mxu0 0.0
    %1586 = vmatprep.subr.mxu0 0.0
    %1587 = vmatpush1.msra.mxu0 0.0
    %1588 = vmatprep.subr.mxu0 0.0
    %1589 = vmatpush1.msra.mxu0 0.0
    %1590 = vmatprep.subr.mxu0 0.0
    %1591 = vmatpush1.msra.mxu0 0.0
    %1592 = vmatprep.subr.mxu0 0.0
    %1593 = vmatpush1.msra.mxu0 0.0
    %1594 = vmatprep.subr.mxu0 0.0
    %1595 = vmatpush1.msra.mxu0 0.0
    %1596 = vmatprep.subr.mxu0 0.0
    %1597 = vmatpush1.msra.mxu0 0.0
    %1598 = vmatprep.subr.mxu0 0.0
    %1599 = vmatpush1.msra.mxu0 0.0
    %1600 = vmatprep.subr.mxu0 0.0
    %1601 = vmatpush1.msra.mxu0 0.0
    %1602 = vmatprep.subr.mxu0 0.0
    %1603 = vmatpush1.msra.mxu0 0.0
    %1604 = vmatprep.subr.mxu0 0.0
    %1605 = vmatpush1.msra.mxu0 0.0
    %1606 = vmatprep.subr.mxu0 0.0
    %1607 = vmatpush1.msra.mxu0 0.0
    %1608 = vmatprep.subr.mxu0 0.0
    %1609 = vmatpush1.msra.mxu0 0.0
    %1610 = vmatprep.mubr.f32.mxu0 0.0
    %1611 = vmatmul.mubr.f32.gmra.mrb[0].mxu0 %v1545
    %v1612 = vpop.f32.mrb[0].mxu0
    %v1613 = vadd.f32 0.0, %v1612
    %v1614 = vpop.f32.mrb[0].mxu0
    %v1615 = vadd.f32 0.0, %v1614
    %1616 = vdwg.mxu0
    %1617 = vmatprep.subr.mxu0 0.0
    %1618 = vmatpush1.msra.mxu0 %v498
    %1619 = vmatprep.subr.mxu0 0.0
    %1620 = vmatpush1.msra.mxu0 %v501
    %1621 = vmatprep.subr.mxu0 0.0
    %1622 = vmatpush1.msra.mxu0 %v504
    %1623 = vmatprep.subr.mxu0 0.0
    %1624 = vmatpush1.msra.mxu0 %v507
    %1625 = vmatprep.subr.mxu0 0.0
    %1626 = vmatpush1.msra.mxu0 %v510
    %1627 = vmatprep.subr.mxu0 0.0
    %1628 = vmatpush1.msra.mxu0 %v513
    %1629 = vmatprep.subr.mxu0 0.0
    %1630 = vmatpush1.msra.mxu0 %v516
    %1631 = vmatprep.subr.mxu0 0.0
    %1632 = vmatpush1.msra.mxu0 %v519
    %1633 = vmatprep.subr.mxu0 0.0
    %1634 = vmatpush1.msra.mxu0 %v522
    %1635 = vmatprep.subr.mxu0 0.0
    %1636 = vmatpush1.msra.mxu0 %v525
    %1637 = vmatprep.subr.mxu0 0.0
    %1638 = vmatpush1.msra.mxu0 %v528
    %1639 = vmatprep.subr.mxu0 0.0
    %1640 = vmatpush1.msra.mxu0 %v531
    %1641 = vmatprep.subr.mxu0 0.0
    %1642 = vmatpush1.msra.mxu0 %v534
    %1643 = vmatprep.subr.mxu0 0.0
    %1644 = vmatpush1.msra.mxu0 %v537
    %1645 = vmatprep.subr.mxu0 0.0
    %1646 = vmatpush1.msra.mxu0 %v540
    %1647 = vmatprep.subr.mxu0 0.0
    %1648 = vmatpush1.msra.mxu0 %v543
    %1649 = vmatprep.subr.mxu0 0.0
    %1650 = vmatpush1.msra.mxu0 0.0
    %1651 = vmatprep.subr.mxu0 0.0
    %1652 = vmatpush1.msra.mxu0 0.0
    %1653 = vmatprep.subr.mxu0 0.0
    %1654 = vmatpush1.msra.mxu0 0.0
    %1655 = vmatprep.subr.mxu0 0.0
    %1656 = vmatpush1.msra.mxu0 0.0
    %1657 = vmatprep.subr.mxu0 0.0
    %1658 = vmatpush1.msra.mxu0 0.0
    %1659 = vmatprep.subr.mxu0 0.0
    %1660 = vmatpush1.msra.mxu0 0.0
    %1661 = vmatprep.subr.mxu0 0.0
    %1662 = vmatpush1.msra.mxu0 0.0
    %1663 = vmatprep.subr.mxu0 0.0
    %1664 = vmatpush1.msra.mxu0 0.0
    %1665 = vmatprep.subr.mxu0 0.0
    %1666 = vmatpush1.msra.mxu0 0.0
    %1667 = vmatprep.subr.mxu0 0.0
    %1668 = vmatpush1.msra.mxu0 0.0
    %1669 = vmatprep.subr.mxu0 0.0
    %1670 = vmatpush1.msra.mxu0 0.0
    %1671 = vmatprep.subr.mxu0 0.0
    %1672 = vmatpush1.msra.mxu0 0.0
    %1673 = vmatprep.subr.mxu0 0.0
    %1674 = vmatpush1.msra.mxu0 0.0
    %1675 = vmatprep.subr.mxu0 0.0
    %1676 = vmatpush1.msra.mxu0 0.0
    %1677 = vmatprep.subr.mxu0 0.0
    %1678 = vmatpush1.msra.mxu0 0.0
    %1679 = vmatprep.subr.mxu0 0.0
    %1680 = vmatpush1.msra.mxu0 0.0
    %1681 = vmatprep.mubr.f32.mxu0 0.0
    %1682 = vmatmul.mubr.f32.gmra.mrb[0].mxu0 %v1545
    %v1683 = vpop.f32.mrb[0].mxu0
    %v1684 = vadd.f32 0.0, %v1683
    %v1685 = vpop.f32.mrb[0].mxu0
    %1686 = vdwg.mxu0
    %v1687 = vadd.f32 %v387, %v1613
    %v1688 = vadd.f32 %v389, %v1615
    %v1689 = vsub.f32 0.0, %v1687
    %v1690 = vsub.f32 0.0, %v1688
    %v1691 = vmul.f32 %v1689, 1.442695
    %v1692 = vpow.pop %v1691
    %v1693 = vmul.f32 %v1690, 1.442695
    %v1694 = vpow.pop %v1693
    %v1695 = vadd.f32 %v1692, 1.0
    %v1696 = vadd.f32 %v1694, 1.0
    %v1697 = vrcp.pop %v1695
    %v1698 = vmul.f32 1.0, %v1697
    %v1699 = vrcp.pop %v1696
    %v1700 = vmul.f32 1.0, %v1699
    %v1701 = vadd.f32 %v1684, %v561
    %v1702 = vmul.f32 %v1698, %v1701
    %v1703 = vadd.f32 %v493, %v1702
    %v1704 = vtanh.pop %v1703
    %v1705 = vsub.f32 1.0, %v1700
    %v1706 = vmul.f32 %v1705, %v1704
    %v1707 = vmul.f32 %v1700, %v1545
    %v1708 = vadd.f32 %v1706, %v1707
    %1709 = vst.msk [vmem:[%s6] sm:$0xff] %vm253, %v1708
    // Predicated region
    $region30: #{question_module_forward.1} parent=1 // pred_check
      _
    $region31: #{question_module_forward.1} parent=1 // pred_check_branch
      %1711 = sbr.rel (0) target = $region33
    $region32: #{question_module_forward.1} parent=1 // pred_region
      _
    $region33: #{question_module_forward.1} parent=1 // pred_fallthru
      _
    // Predicated region
    $region34: #{question_module_forward.1} parent=1 // pred_check
      _
    $region35: #{question_module_forward.1} parent=1 // pred_check_branch
      %1713 = sbr.rel (0) target = $region37
    $region36: #{question_module_forward.1} parent=1 // pred_region
      _
    $region37: #{question_module_forward.1} parent=1 // pred_fallthru
      _
    %1714 = vsyncpa [#allocation3], 1

</llo_original>
